<compile_context>
chip_gen: v5e
topology: v5e:2x2
jax: 0.10.0
libtpu: 0.0.40
codegen_flags: <defaults>
</compile_context>

<pallas_src>
import functools

import jax
import jax.numpy as jnp
from jax.experimental import pallas as pl
from jax.experimental.pallas import tpu as pltpu


INPUT_SIZE = 25
HIDDEN1 = 256
HIDDEN2 = 512
HIDDEN3 = 256
HIDDEN4 = 128
NUM_CLASSES = 1203

K_PAD = 32          # padded input feature dim (25 -> 32)
OUT_PAD = 1280      # padded output dim (1203 -> 1280), multiple of 128


def _round_up(x, m):
    return (x + m - 1) // m * m


def simplenet_kernel(x_ref,
                     w1_ref, b1_ref,
                     w2_ref, b2_ref,
                     w3_ref, b3_ref,
                     w4_ref, b4_ref,
                     w5_ref, b5_ref,
                     o_ref):
    """One batch tile through all five layers.

    bf16 MXU operands, f32 accumulation via preferred_element_type, f32
    bias-add / ReLU on the VPU (v5e has no bf16 VPU datapath, and the VPU has
    plenty of slack — DMA is the binding resource)."""
    h = jnp.dot(x_ref[...], w1_ref[...],
                preferred_element_type=jnp.float32) + b1_ref[...]
    h = jnp.maximum(h, 0.0)

    h = jnp.dot(h.astype(jnp.bfloat16), w2_ref[...],
                preferred_element_type=jnp.float32) + b2_ref[...]
    h = jnp.maximum(h, 0.0)

    h = jnp.dot(h.astype(jnp.bfloat16), w3_ref[...],
                preferred_element_type=jnp.float32) + b3_ref[...]
    h = jnp.maximum(h, 0.0)

    h = jnp.dot(h.astype(jnp.bfloat16), w4_ref[...],
                preferred_element_type=jnp.float32) + b4_ref[...]
    h = jnp.maximum(h, 0.0)

    # Final layer: no ReLU. Output tile is lane-dense (OUT_PAD = 1280);
    # single cast (to the output dtype, bf16 by default) at the store.
    out = jnp.dot(h.astype(jnp.bfloat16), w5_ref[...],
                  preferred_element_type=jnp.float32) + b5_ref[...]
    o_ref[...] = out.astype(o_ref.dtype)


def _choose_tiling(B, tm):
    """Pick (b_pad, tm_eff).

    * batch padded to a multiple of 16 (bf16 sublane packing), tiles to 256
      (MXU M-tile) when splitting.
    * small batch -> single tile (regime is weight-DMA bound; tiling is moot).
    * large batch -> tile of at most `tm`, and at least 2 grid steps so the
      "parallel" batch axis can shard across both v7x TensorCores.
    """
    tm = max(256, (tm // 256) * 256)
    b16 = _round_up(B, 16)
    if b16 <= 512:
        return b16, b16
    tm_eff = min(tm, _round_up(pl.cdiv(b16, 2), 256))
    b_pad = _round_up(b16, tm_eff)
    return b_pad, tm_eff


@functools.partial(jax.jit, static_argnames=("tm", "out_dtype", "trim"))
def simplenet_forward(x, kernel_params, *, tm=1024, out_dtype=jnp.bfloat16,
                      trim=True):
    """x: (B, INPUT_SIZE) float32. kernel_params: padded/bf16 params
    (see prepare_params).

    trim=True returns (B, NUM_CLASSES) matching the PyTorch module; large-batch
    callers should pass trim=False and consume the padded (b_pad, OUT_PAD)
    buffer directly to avoid an extra full-output HBM copy."""
    B = x.shape[0]
    b_pad, tm_eff = _choose_tiling(B, tm)

    # Pad batch (zeros) and features 25 -> 32 (zeros), cast input to bf16.
    x_p = jnp.zeros((b_pad, K_PAD), jnp.bfloat16)
    x_p = x_p.at[:B, :INPUT_SIZE].set(x.astype(jnp.bfloat16))

    grid = (b_pad // tm_eff,)

    # Activations / output are tiled over the batch; weights & biases use a
    # constant index_map so they are DMA'd once and stay VMEM-resident.
    def const_spec(arr):
        return pl.BlockSpec(arr.shape, lambda i: (0, 0))

    in_specs = [pl.BlockSpec((tm_eff, K_PAD), lambda i: (i, 0))]
    in_specs += [const_spec(p) for p in kernel_params]
    out_spec = pl.BlockSpec((tm_eff, OUT_PAD), lambda i: (i, 0))

    out_itemsize = jnp.dtype(out_dtype).itemsize
    flops = 2 * b_pad * (K_PAD * HIDDEN1 + HIDDEN1 * HIDDEN2 +
                         HIDDEN2 * HIDDEN3 + HIDDEN3 * HIDDEN4 +
                         HIDDEN4 * OUT_PAD)
    weight_bytes = sum(int(p.size) * p.dtype.itemsize for p in kernel_params)
    bytes_accessed = (weight_bytes
                      + x_p.size * x_p.dtype.itemsize
                      + b_pad * OUT_PAD * out_itemsize)

    out_padded = pl.pallas_call(
        simplenet_kernel,
        out_shape=jax.ShapeDtypeStruct((b_pad, OUT_PAD), out_dtype),
        grid=grid,
        in_specs=in_specs,
        out_specs=out_spec,
        compiler_params=pltpu.CompilerParams(
            dimension_semantics=("parallel",),
            vmem_limit_bytes=48 * 1024 * 1024),
        cost_estimate=pl.CostEstimate(
            flops=flops, transcendentals=0, bytes_accessed=bytes_accessed),
    )(x_p, *kernel_params)

    if not trim:
        return out_padded
    return out_padded[:B, :NUM_CLASSES]


def init_params(key):
    """Canonical f32 params, nn.Linear-style init, stored as (in, out) weights
    and (1, out) biases."""
    sizes = [(INPUT_SIZE, HIDDEN1), (HIDDEN1, HIDDEN2), (HIDDEN2, HIDDEN3),
             (HIDDEN3, HIDDEN4), (HIDDEN4, NUM_CLASSES)]
    params = []
    keys = jax.random.split(key, 2 * len(sizes))
    for i, (fan_in, fan_out) in enumerate(sizes):
        bound = 1.0 / (fan_in ** 0.5)  # PyTorch default init scale
        w = jax.random.uniform(keys[2 * i], (fan_in, fan_out),
                               minval=-bound, maxval=bound, dtype=jnp.float32)
        b = jax.random.uniform(keys[2 * i + 1], (1, fan_out),
                               minval=-bound, maxval=bound, dtype=jnp.float32)
        params.append(w)
        params.append(b)
    return params


def prepare_params(params):
    """Pad (w1: K 25->32, w5/b5: N 1203->1280) and cast weights to bf16.
    Biases stay f32 (bias-add / ReLU run in f32 on the VPU). Pad regions are
    zero so results are unchanged."""
    w1, b1, w2, b2, w3, b3, w4, b4, w5, b5 = params

    w1_p = jnp.zeros((K_PAD, HIDDEN1), jnp.float32).at[:INPUT_SIZE, :].set(w1)
    w5_p = jnp.zeros((HIDDEN4, OUT_PAD), jnp.float32).at[:, :NUM_CLASSES].set(w5)
    b5_p = jnp.zeros((1, OUT_PAD), jnp.float32).at[:, :NUM_CLASSES].set(b5)

    return [
        w1_p.astype(jnp.bfloat16), b1,
        w2.astype(jnp.bfloat16), b2,
        w3.astype(jnp.bfloat16), b3,
        w4.astype(jnp.bfloat16), b4,
        w5_p.astype(jnp.bfloat16), b5_p,
    ]


def reference_forward(x, params, out_dtype=jnp.bfloat16):
    """Pure-JAX reference emulating the kernel numerics (bf16 operands,
    f32 accumulation, f32 bias/ReLU, final cast to out_dtype)."""
    w1, b1, w2, b2, w3, b3, w4, b4, w5, b5 = params

    def dense(h, w, b, relu):
        y = jnp.dot(h.astype(jnp.bfloat16), w.astype(jnp.bfloat16),
                    preferred_element_type=jnp.float32) + b
        return jnp.maximum(y, 0.0) if relu else y

    h = dense(x, w1, b1, True)
    h = dense(h, w2, b2, True)
    h = dense(h, w3, b3, True)
    h = dense(h, w4, b4, True)
    return dense(h, w5, b5, False).astype(out_dtype)


if __name__ == "__main__":
    key = jax.random.PRNGKey(0)
    k_x, k_p = jax.random.split(key)

    B = 8
    x = jax.random.normal(k_x, (B, INPUT_SIZE), dtype=jnp.float32)
    params = init_params(k_p)
    kparams = prepare_params(params)

    out = simplenet_forward(x, kparams)          # (B, NUM_CLASSES), bf16 logits
    out = jax.block_until_ready(out)

    ref = reference_forward(x, params)
    assert out.shape == (B, NUM_CLASSES), out.shape
    err = float(jnp.max(jnp.abs(out.astype(jnp.float32)
                                - ref.astype(jnp.float32))))
    assert err < 2e-2, f"mismatch vs reference: max abs err = {err}"

    print("KERNEL_OK")
</pallas_src>

<mosaic_0001>
module attributes {stable_mosaic.version = 11 : i64} {
  func.func @simplenet_kernel(%arg0: i32, %arg1: memref<16x32xbf16, #tpu.memory_space<vmem>>, %arg2: memref<32x256xbf16, #tpu.memory_space<vmem>>, %arg3: memref<1x256xf32, #tpu.memory_space<vmem>>, %arg4: memref<256x512xbf16, #tpu.memory_space<vmem>>, %arg5: memref<1x512xf32, #tpu.memory_space<vmem>>, %arg6: memref<512x256xbf16, #tpu.memory_space<vmem>>, %arg7: memref<1x256xf32, #tpu.memory_space<vmem>>, %arg8: memref<256x128xbf16, #tpu.memory_space<vmem>>, %arg9: memref<1x128xf32, #tpu.memory_space<vmem>>, %arg10: memref<128x1280xbf16, #tpu.memory_space<vmem>>, %arg11: memref<1x1280xf32, #tpu.memory_space<vmem>>, %arg12: memref<16x1280xbf16, #tpu.memory_space<vmem>>) attributes {dimension_semantics = [#tpu.dimension_semantics<parallel>], iteration_bounds = array<i64: 1>, scalar_prefetch = 0 : i64, scratch_operands = 0 : i64, tpu.core_type = #tpu.core_type<tc>, window_params = [{transform_indices = @transform_0, window_bounds = array<i64: 16, 32>}, {pipeline_mode = #tpu.pipeline_mode<synchronous>, transform_indices = @transform_1, window_bounds = array<i64: 32, 256>}, {pipeline_mode = #tpu.pipeline_mode<synchronous>, transform_indices = @transform_2, window_bounds = array<i64: 1, 256>}, {pipeline_mode = #tpu.pipeline_mode<synchronous>, transform_indices = @transform_3, window_bounds = array<i64: 256, 512>}, {pipeline_mode = #tpu.pipeline_mode<synchronous>, transform_indices = @transform_4, window_bounds = array<i64: 1, 512>}, {pipeline_mode = #tpu.pipeline_mode<synchronous>, transform_indices = @transform_5, window_bounds = array<i64: 512, 256>}, {pipeline_mode = #tpu.pipeline_mode<synchronous>, transform_indices = @transform_6, window_bounds = array<i64: 1, 256>}, {pipeline_mode = #tpu.pipeline_mode<synchronous>, transform_indices = @transform_7, window_bounds = array<i64: 256, 128>}, {pipeline_mode = #tpu.pipeline_mode<synchronous>, transform_indices = @transform_8, window_bounds = array<i64: 1, 128>}, {pipeline_mode = #tpu.pipeline_mode<synchronous>, transform_indices = @transform_9, window_bounds = array<i64: 128, 1280>}, {pipeline_mode = #tpu.pipeline_mode<synchronous>, transform_indices = @transform_10, window_bounds = array<i64: 1, 1280>}, {transform_indices = @transform_11, window_bounds = array<i64: 16, 1280>}]} {
    %c0 = arith.constant 0 : index
    %c0_0 = arith.constant 0 : index
    %0 = vector.load %arg1[%c0, %c0_0] : memref<16x32xbf16, #tpu.memory_space<vmem>>, vector<16x32xbf16>
    %c0_1 = arith.constant 0 : index
    %c0_2 = arith.constant 0 : index
    %1 = vector.load %arg2[%c0_1, %c0_2] : memref<32x256xbf16, #tpu.memory_space<vmem>>, vector<32x256xbf16>
    %cst = arith.constant dense<0.000000e+00> : vector<16x256xf32>
    %2 = tpu.matmul %0, %1, %cst {dimension_numbers = #tpu.dot_dimension_numbers<[1], [0], [0], [1], [0, 0, 1, 1], [], []>} : vector<16x32xbf16>, vector<32x256xbf16>, vector<16x256xf32> -> vector<16x256xf32>
    %c0_3 = arith.constant 0 : index
    %c0_4 = arith.constant 0 : index
    %3 = vector.load %arg3[%c0_3, %c0_4] : memref<1x256xf32, #tpu.memory_space<vmem>>, vector<1x256xf32>
    %4 = vector.broadcast %3 : vector<1x256xf32> to vector<16x256xf32>
    %5 = arith.addf %2, %4 : vector<16x256xf32>
    %cst_5 = arith.constant 0.000000e+00 : f32
    %6 = vector.broadcast %cst_5 : f32 to vector<16x256xf32>
    %7 = arith.maximumf %5, %6 : vector<16x256xf32>
    %8 = arith.truncf %7 : vector<16x256xf32> to vector<16x256xbf16>
    %c0_6 = arith.constant 0 : index
    %c0_7 = arith.constant 0 : index
    %9 = vector.load %arg4[%c0_6, %c0_7] : memref<256x512xbf16, #tpu.memory_space<vmem>>, vector<256x512xbf16>
    %cst_8 = arith.constant dense<0.000000e+00> : vector<16x512xf32>
    %10 = tpu.matmul %8, %9, %cst_8 {dimension_numbers = #tpu.dot_dimension_numbers<[1], [0], [0], [1], [0, 0, 1, 1], [], []>} : vector<16x256xbf16>, vector<256x512xbf16>, vector<16x512xf32> -> vector<16x512xf32>
    %c0_9 = arith.constant 0 : index
    %c0_10 = arith.constant 0 : index
    %11 = vector.load %arg5[%c0_9, %c0_10] : memref<1x512xf32, #tpu.memory_space<vmem>>, vector<1x512xf32>
    %12 = vector.broadcast %11 : vector<1x512xf32> to vector<16x512xf32>
    %13 = arith.addf %10, %12 : vector<16x512xf32>
    %cst_11 = arith.constant 0.000000e+00 : f32
    %14 = vector.broadcast %cst_11 : f32 to vector<16x512xf32>
    %15 = arith.maximumf %13, %14 : vector<16x512xf32>
    %16 = arith.truncf %15 : vector<16x512xf32> to vector<16x512xbf16>
    %c0_12 = arith.constant 0 : index
    %c0_13 = arith.constant 0 : index
    %17 = vector.load %arg6[%c0_12, %c0_13] : memref<512x256xbf16, #tpu.memory_space<vmem>>, vector<512x256xbf16>
    %cst_14 = arith.constant dense<0.000000e+00> : vector<16x256xf32>
    %18 = tpu.matmul %16, %17, %cst_14 {dimension_numbers = #tpu.dot_dimension_numbers<[1], [0], [0], [1], [0, 0, 1, 1], [], []>} : vector<16x512xbf16>, vector<512x256xbf16>, vector<16x256xf32> -> vector<16x256xf32>
    %c0_15 = arith.constant 0 : index
    %c0_16 = arith.constant 0 : index
    %19 = vector.load %arg7[%c0_15, %c0_16] : memref<1x256xf32, #tpu.memory_space<vmem>>, vector<1x256xf32>
    %20 = vector.broadcast %19 : vector<1x256xf32> to vector<16x256xf32>
    %21 = arith.addf %18, %20 : vector<16x256xf32>
    %cst_17 = arith.constant 0.000000e+00 : f32
    %22 = vector.broadcast %cst_17 : f32 to vector<16x256xf32>
    %23 = arith.maximumf %21, %22 : vector<16x256xf32>
    %24 = arith.truncf %23 : vector<16x256xf32> to vector<16x256xbf16>
    %c0_18 = arith.constant 0 : index
    %c0_19 = arith.constant 0 : index
    %25 = vector.load %arg8[%c0_18, %c0_19] : memref<256x128xbf16, #tpu.memory_space<vmem>>, vector<256x128xbf16>
    %cst_20 = arith.constant dense<0.000000e+00> : vector<16x128xf32>
    %26 = tpu.matmul %24, %25, %cst_20 {dimension_numbers = #tpu.dot_dimension_numbers<[1], [0], [0], [1], [0, 0, 1, 1], [], []>} : vector<16x256xbf16>, vector<256x128xbf16>, vector<16x128xf32> -> vector<16x128xf32>
    %c0_21 = arith.constant 0 : index
    %c0_22 = arith.constant 0 : index
    %27 = vector.load %arg9[%c0_21, %c0_22] : memref<1x128xf32, #tpu.memory_space<vmem>>, vector<1x128xf32>
    %28 = vector.broadcast %27 : vector<1x128xf32> to vector<16x128xf32>
    %29 = arith.addf %26, %28 : vector<16x128xf32>
    %cst_23 = arith.constant 0.000000e+00 : f32
    %30 = vector.broadcast %cst_23 : f32 to vector<16x128xf32>
    %31 = arith.maximumf %29, %30 : vector<16x128xf32>
    %32 = arith.truncf %31 : vector<16x128xf32> to vector<16x128xbf16>
    %c0_24 = arith.constant 0 : index
    %c0_25 = arith.constant 0 : index
    %33 = vector.load %arg10[%c0_24, %c0_25] : memref<128x1280xbf16, #tpu.memory_space<vmem>>, vector<128x1280xbf16>
    %cst_26 = arith.constant dense<0.000000e+00> : vector<16x1280xf32>
    %34 = tpu.matmul %32, %33, %cst_26 {dimension_numbers = #tpu.dot_dimension_numbers<[1], [0], [0], [1], [0, 0, 1, 1], [], []>} : vector<16x128xbf16>, vector<128x1280xbf16>, vector<16x1280xf32> -> vector<16x1280xf32>
    %c0_27 = arith.constant 0 : index
    %c0_28 = arith.constant 0 : index
    %35 = vector.load %arg11[%c0_27, %c0_28] : memref<1x1280xf32, #tpu.memory_space<vmem>>, vector<1x1280xf32>
    %36 = vector.broadcast %35 : vector<1x1280xf32> to vector<16x1280xf32>
    %37 = arith.addf %34, %36 : vector<16x1280xf32>
    %38 = arith.truncf %37 : vector<16x1280xf32> to vector<16x1280xbf16>
    %c0_29 = arith.constant 0 : index
    %c0_30 = arith.constant 0 : index
    %39 = vector.load %arg12[%c0_29, %c0_30] : memref<16x1280xbf16, #tpu.memory_space<vmem>>, vector<16x1280xbf16>
    tpu.vector_store %arg12[%c0_29, %c0_30], %38 {strides = array<i32>} : memref<16x1280xbf16, #tpu.memory_space<vmem>>, vector<16x1280xbf16>,
    return
  }
  func.func @transform_0(%arg0: i32) -> (i32, i32) {
    %c0_i32 = arith.constant 0 : i32
    %c0_i32_0 = arith.constant 0 : i32
    return %arg0, %c0_i32 : i32, i32
  }
  func.func @transform_1(%arg0: i32) -> (i32, i32) {
    %c0_i32 = arith.constant 0 : i32
    %c0_i32_0 = arith.constant 0 : i32
    %c0_i32_1 = arith.constant 0 : i32
    return %c0_i32, %c0_i32_0 : i32, i32
  }
  func.func @transform_2(%arg0: i32) -> (i32, i32) {
    %c0_i32 = arith.constant 0 : i32
    %c0_i32_0 = arith.constant 0 : i32
    %c0_i32_1 = arith.constant 0 : i32
    return %c0_i32, %c0_i32_0 : i32, i32
  }
  func.func @transform_3(%arg0: i32) -> (i32, i32) {
    %c0_i32 = arith.constant 0 : i32
    %c0_i32_0 = arith.constant 0 : i32
    %c0_i32_1 = arith.constant 0 : i32
    return %c0_i32, %c0_i32_0 : i32, i32
  }
  func.func @transform_4(%arg0: i32) -> (i32, i32) {
    %c0_i32 = arith.constant 0 : i32
    %c0_i32_0 = arith.constant 0 : i32
    %c0_i32_1 = arith.constant 0 : i32
    return %c0_i32, %c0_i32_0 : i32, i32
  }
  func.func @transform_5(%arg0: i32) -> (i32, i32) {
    %c0_i32 = arith.constant 0 : i32
    %c0_i32_0 = arith.constant 0 : i32
    %c0_i32_1 = arith.constant 0 : i32
    return %c0_i32, %c0_i32_0 : i32, i32
  }
  func.func @transform_6(%arg0: i32) -> (i32, i32) {
    %c0_i32 = arith.constant 0 : i32
    %c0_i32_0 = arith.constant 0 : i32
    %c0_i32_1 = arith.constant 0 : i32
    return %c0_i32, %c0_i32_0 : i32, i32
  }
  func.func @transform_7(%arg0: i32) -> (i32, i32) {
    %c0_i32 = arith.constant 0 : i32
    %c0_i32_0 = arith.constant 0 : i32
    %c0_i32_1 = arith.constant 0 : i32
    return %c0_i32, %c0_i32_0 : i32, i32
  }
  func.func @transform_8(%arg0: i32) -> (i32, i32) {
    %c0_i32 = arith.constant 0 : i32
    %c0_i32_0 = arith.constant 0 : i32
    %c0_i32_1 = arith.constant 0 : i32
    return %c0_i32, %c0_i32_0 : i32, i32
  }
  func.func @transform_9(%arg0: i32) -> (i32, i32) {
    %c0_i32 = arith.constant 0 : i32
    %c0_i32_0 = arith.constant 0 : i32
    %c0_i32_1 = arith.constant 0 : i32
    return %c0_i32, %c0_i32_0 : i32, i32
  }
  func.func @transform_10(%arg0: i32) -> (i32, i32) {
    %c0_i32 = arith.constant 0 : i32
    %c0_i32_0 = arith.constant 0 : i32
    %c0_i32_1 = arith.constant 0 : i32
    return %c0_i32, %c0_i32_0 : i32, i32
  }
  func.func @transform_11(%arg0: i32) -> (i32, i32) {
    %c0_i32 = arith.constant 0 : i32
    %c0_i32_0 = arith.constant 0 : i32
    return %arg0, %c0_i32 : i32, i32
  }
}

</mosaic_0001>

<llo_original>
// kernel: simplenet_forward.1
$region0: #{simplenet_forward.1}
  #allocation0 [shape = 'u32[]', space=smem, size = 0x4, offset = 0x4, fixed_abs, tag = 'smem constant byte address 0x4 - core index']
  #allocation1 [shape = 'u32[72,128]{1,0:T(1,128)}', space=vmem, size = 0x9000, scoped, tag = 'internal scratch']
  %s0 = inlined_call_operand.vmem [shape: bf16[16,32], index: 0, kind: input, shape index: {}]
  %s1 = inlined_call_operand.hbm [shape: bf16[32,256], index: 1, kind: input, shape index: {}]
  %s2 = inlined_call_operand.vmem [shape: f32[1,256], index: 2, kind: input, shape index: {}]
  %s3 = inlined_call_operand.hbm [shape: bf16[256,512], index: 3, kind: input, shape index: {}]
  %s4 = inlined_call_operand.vmem [shape: f32[1,512], index: 4, kind: input, shape index: {}]
  %s5 = inlined_call_operand.hbm [shape: bf16[512,256], index: 5, kind: input, shape index: {}]
  %s6 = inlined_call_operand.vmem [shape: f32[1,256], index: 6, kind: input, shape index: {}]
  %s7 = inlined_call_operand.hbm [shape: bf16[256,128], index: 7, kind: input, shape index: {}]
  %s8 = inlined_call_operand.vmem [shape: f32[1,128], index: 8, kind: input, shape index: {}]
  %s9 = inlined_call_operand.hbm [shape: bf16[128,1280], index: 9, kind: input, shape index: {}]
  %s10 = inlined_call_operand.vmem [shape: f32[1,1280], index: 10, kind: input, shape index: {}]
  %s11 = inlined_call_operand.vmem [shape: bf16[16,1280], index: 11, kind: output, shape index: {}]
  %s12 = sld [smem:[#allocation0]]
  $region74: #{simplenet_forward.1} parent=0
    _
  %s14 = ssub.s32 1, %s12
  %s15 = scalar_select 0, %s14, %s12
  $region1: #{simplenet_forward.1} parent=0
    #allocation2 [shape = 'u8[16384]{0}', space=vmem, size = 0x4000, scoped, tag = 'input window, operand 1, single buffered']
    #allocation3 [shape = 's32[1]{0}', space=sflag, size = 0x4, scoped, tag = 'scoped memory for simplenet_forward.1']
    #allocation4 [shape = 'u8[262144]{0}', space=vmem, size = 0x40000, scoped, tag = 'input window, operand 3, single buffered']
    #allocation5 [shape = 's32[1]{0}', space=sflag, size = 0x4, scoped, tag = 'scoped memory for simplenet_forward.1']
    #allocation6 [shape = 'u8[262144]{0}', space=vmem, size = 0x40000, scoped, tag = 'input window, operand 5, single buffered']
    #allocation7 [shape = 'u8[65536]{0}', space=vmem, size = 0x10000, scoped, tag = 'input window, operand 7, single buffered']
    #allocation8 [shape = 's32[1]{0}', space=sflag, size = 0x4, scoped, tag = 'scoped memory for simplenet_forward.1']
    #allocation9 [shape = 'u8[327680]{0}', space=vmem, size = 0x50000, scoped, tag = 'input window, operand 9, single buffered']
    %16 = vsyncpa [#allocation3], 0
    %17 = vsyncpa [#allocation5], 0
    %18 = vsyncpa [#allocation8], 0
    // Predicated region
    $region2: #{simplenet_forward.1} parent=1 // pred_check
      _
    $region3: #{simplenet_forward.1} parent=1 // pred_check_branch
      %20 = sbr.rel (0) target = $region5
    $region4: #{simplenet_forward.1} parent=1 // pred_region
      _
    $region5: #{simplenet_forward.1} parent=1 // pred_fallthru
      _
    // Predicated region
    $region6: #{simplenet_forward.1} parent=1 // pred_check
      _
    $region7: #{simplenet_forward.1} parent=1 // pred_check_branch
      %22 = sbr.rel (0) target = $region9
    $region8: #{simplenet_forward.1} parent=1 // pred_region
      %24 = vsyncadd [#allocation3], 0
      %s25 = sshll.u32 %s1, 4
      %s26 = int_to_ptr.hbm [resolvable:$true] %s25
      %s27 = sshll.u32 [#allocation2], 4
      %s28 = int_to_ptr.vmem [resolvable:$true] %s27
      %33 = dma.hbm_to_vmem [thread:$0]  %s26, 512, %s28, [#allocation3], 128, 128, 8
    $region9: #{simplenet_forward.1} parent=1 // pred_fallthru
      _
    // Predicated region
    $region10: #{simplenet_forward.1} parent=1 // pred_check
      _
    $region11: #{simplenet_forward.1} parent=1 // pred_check_branch
      %35 = sbr.rel (0) target = $region13
    $region12: #{simplenet_forward.1} parent=1 // pred_region
      _
    $region13: #{simplenet_forward.1} parent=1 // pred_fallthru
      _
    // Predicated region
    $region14: #{simplenet_forward.1} parent=1 // pred_check
      _
    $region15: #{simplenet_forward.1} parent=1 // pred_check_branch
      %37 = sbr.rel (0) target = $region17
    $region16: #{simplenet_forward.1} parent=1 // pred_region
      %39 = vsyncadd [#allocation5], 0
      %s40 = sshll.u32 %s3, 4
      %s41 = int_to_ptr.hbm [resolvable:$true] %s40
      %s42 = sshll.u32 [#allocation4], 4
      %s43 = int_to_ptr.vmem [resolvable:$true] %s42
      %48 = dma.hbm_to_vmem [thread:$0]  %s41, 8192, %s43, [#allocation5], 256, 256, 16
    $region17: #{simplenet_forward.1} parent=1 // pred_fallthru
      _
    // Predicated region
    $region18: #{simplenet_forward.1} parent=1 // pred_check
      _
    $region19: #{simplenet_forward.1} parent=1 // pred_check_branch
      %50 = sbr.rel (0) target = $region21
    $region20: #{simplenet_forward.1} parent=1 // pred_region
      _
    $region21: #{simplenet_forward.1} parent=1 // pred_fallthru
      _
    // Predicated region
    $region22: #{simplenet_forward.1} parent=1 // pred_check
      _
    $region23: #{simplenet_forward.1} parent=1 // pred_check_branch
      %52 = sbr.rel (0) target = $region25
    $region24: #{simplenet_forward.1} parent=1 // pred_region
      %54 = vsyncadd [#allocation5], 0
      %s55 = sshll.u32 %s5, 4
      %s56 = int_to_ptr.hbm [resolvable:$true] %s55
      %s57 = sshll.u32 [#allocation6], 4
      %s58 = int_to_ptr.vmem [resolvable:$true] %s57
      %63 = dma.hbm_to_vmem [thread:$0]  %s56, 8192, %s58, [#allocation5], 128, 128, 8
    $region25: #{simplenet_forward.1} parent=1 // pred_fallthru
      _
    // Predicated region
    $region26: #{simplenet_forward.1} parent=1 // pred_check
      _
    $region27: #{simplenet_forward.1} parent=1 // pred_check_branch
      %65 = sbr.rel (0) target = $region29
    $region28: #{simplenet_forward.1} parent=1 // pred_region
      _
    $region29: #{simplenet_forward.1} parent=1 // pred_fallthru
      _
    // Predicated region
    $region30: #{simplenet_forward.1} parent=1 // pred_check
      _
    $region31: #{simplenet_forward.1} parent=1 // pred_check_branch
      %67 = sbr.rel (0) target = $region33
    $region32: #{simplenet_forward.1} parent=1 // pred_region
      %69 = vsyncadd [#allocation8], 0
      %s70 = sshll.u32 %s7, 4
      %s71 = int_to_ptr.hbm [resolvable:$true] %s70
      %s72 = sshll.u32 [#allocation7], 4
      %s73 = int_to_ptr.vmem [resolvable:$true] %s72
      %78 = dma.hbm_to_vmem [thread:$0]  %s71, 2048, %s73, [#allocation8], 64, 64, 4
    $region33: #{simplenet_forward.1} parent=1 // pred_fallthru
      _
    // Predicated region
    $region34: #{simplenet_forward.1} parent=1 // pred_check
      _
    $region35: #{simplenet_forward.1} parent=1 // pred_check_branch
      %80 = sbr.rel (0) target = $region37
    $region36: #{simplenet_forward.1} parent=1 // pred_region
      _
    $region37: #{simplenet_forward.1} parent=1 // pred_fallthru
      _
    // Predicated region
    $region38: #{simplenet_forward.1} parent=1 // pred_check
      _
    $region39: #{simplenet_forward.1} parent=1 // pred_check_branch
      %82 = sbr.rel (0) target = $region41
    $region40: #{simplenet_forward.1} parent=1 // pred_region
      %84 = vsyncadd [#allocation8], 0
      %s85 = sshll.u32 %s9, 4
      %s86 = int_to_ptr.hbm [resolvable:$true] %s85
      %s87 = sshll.u32 [#allocation9], 4
      %s88 = int_to_ptr.vmem [resolvable:$true] %s87
      %93 = dma.hbm_to_vmem [thread:$0]  %s86, 10240, %s88, [#allocation8], 640, 640, 40
    $region41: #{simplenet_forward.1} parent=1 // pred_fallthru
      _
    // Predicated region
    $region42: #{simplenet_forward.1} parent=1 // pred_check
      _
    $region43: #{simplenet_forward.1} parent=1 // pred_check_branch
      %95 = sbr.rel (0) target = $region45
    $region44: #{simplenet_forward.1} parent=1 // pred_region
      _
    $region45: #{simplenet_forward.1} parent=1 // pred_fallthru
      _
    // Predicated region
    $region46: #{simplenet_forward.1} parent=1 // pred_check
      _
    $region47: #{simplenet_forward.1} parent=1 // pred_check_branch
      %97 = sbr.rel (0) target = $region49
    $region48: #{simplenet_forward.1} parent=1 // pred_region
      %99 = dma.done [#allocation3], 512
    $region49: #{simplenet_forward.1} parent=1 // pred_fallthru
      _
    // Predicated region
    $region50: #{simplenet_forward.1} parent=1 // pred_check
      _
    $region51: #{simplenet_forward.1} parent=1 // pred_check_branch
      %101 = sbr.rel (0) target = $region53
    $region52: #{simplenet_forward.1} parent=1 // pred_region
      %103 = dma.done [#allocation5], 8192
    $region53: #{simplenet_forward.1} parent=1 // pred_fallthru
      _
    // Predicated region
    $region54: #{simplenet_forward.1} parent=1 // pred_check
      _
    $region55: #{simplenet_forward.1} parent=1 // pred_check_branch
      %105 = sbr.rel (0) target = $region57
    $region56: #{simplenet_forward.1} parent=1 // pred_region
      %107 = dma.done [#allocation5], 8192
    $region57: #{simplenet_forward.1} parent=1 // pred_fallthru
      _
    // Predicated region
    $region58: #{simplenet_forward.1} parent=1 // pred_check
      _
    $region59: #{simplenet_forward.1} parent=1 // pred_check_branch
      %109 = sbr.rel (0) target = $region61
    $region60: #{simplenet_forward.1} parent=1 // pred_region
      %111 = dma.done [#allocation8], 2048
    $region61: #{simplenet_forward.1} parent=1 // pred_fallthru
      _
    // Predicated region
    $region62: #{simplenet_forward.1} parent=1 // pred_check
      _
    $region63: #{simplenet_forward.1} parent=1 // pred_check_branch
      %113 = sbr.rel (0) target = $region65
    $region64: #{simplenet_forward.1} parent=1 // pred_region
      %115 = dma.done [#allocation8], 10240
    $region65: #{simplenet_forward.1} parent=1 // pred_fallthru
      _
    %v117 = vld [vmem:[%s0] sm:$0xf]
    %v118 = vld [vmem:[%s0 + $0x4] sm:$0xf]
    %v119 = vld [vmem:[#allocation2] sm:$0xff]
    %v120 = vld [vmem:[#allocation2 + $0x8] sm:$0xff]
    %v121 = vld [vmem:[#allocation2 + $0x10] sm:$0xff]
    %v122 = vld [vmem:[#allocation2 + $0x18] sm:$0xff]
    %v123 = vld [vmem:[%s2] sm:$0x3]
    %v125 = vperm.slane %v123, 0
    %v126 = vperm.slane %v123, 1
    %v131 = vunpack.c.l.b16 %v117
    %v132 = vunpack.c.l.b16 %v118
    %v133 = vpack.c.b16 %v132, %v131
    %v138 = vunpack.c.l.b16 %v119
    %v139 = vunpack.c.h.b16 %v119
    %v140 = vunpack.c.l.b16 %v120
    %v141 = vunpack.c.h.b16 %v120
    %v142 = vunpack.c.l.b16 %v121
    %v143 = vunpack.c.h.b16 %v121
    %v144 = vunpack.c.l.b16 %v122
    %v145 = vunpack.c.h.b16 %v122
    %v146 = vpack.c.b16 %v140, %v138
    %v147 = vpack.c.b16 %v141, %v139
    %v148 = vpack.c.b16 %v144, %v142
    %v149 = vpack.c.b16 %v145, %v143
    %vm154 = vcmask 261120
    %v156 = vsel %vm154, %v133, 0
    %158 = vmatpush.bf16.msra.mxu0 0
    %159 = vmatpush.bf16.msra.mxu0 0
    %160 = vmatpush.bf16.msra.mxu0 0
    %161 = vmatpush.bf16.msra.mxu0 0
    %162 = vmatpush.bf16.msra.mxu0 0
    %163 = vmatpush.bf16.msra.mxu0 0
    %164 = vmatpush.bf16.msra.mxu0 %v148
    %165 = vmatpush.bf16.msra.mxu0 %v146
    %166 = vmatmul.bf16.gmra.mxu0 %v156
    %v167 = vpop.f32.mrf.mxu0
    %v168 = vadd.f32 %v125, %v167
    %v169 = vpop.f32.mrf.mxu0
    %v170 = vadd.f32 %v125, %v169
    %171 = vdwg.mxu0
    %172 = vmatpush.bf16.msra.mxu0 0
    %173 = vmatpush.bf16.msra.mxu0 0
    %174 = vmatpush.bf16.msra.mxu0 0
    %175 = vmatpush.bf16.msra.mxu0 0
    %176 = vmatpush.bf16.msra.mxu0 0
    %177 = vmatpush.bf16.msra.mxu0 0
    %178 = vmatpush.bf16.msra.mxu0 %v149
    %179 = vmatpush.bf16.msra.mxu0 %v147
    %180 = vmatmul.bf16.gmra.mxu0 %v156
    %v181 = vpop.f32.mrf.mxu0
    %v182 = vadd.f32 %v126, %v181
    %v183 = vpop.f32.mrf.mxu0
    %v184 = vadd.f32 %v126, %v183
    %185 = vdwg.mxu0
    %v186 = vmax.f32 %v168, 0.0
    %v187 = vmax.f32 %v182, 0.0
    %v188 = vmax.f32 %v170, 0.0
    %v189 = vmax.f32 %v184, 0.0
    %v190 = vpack.c.bf16 %v188, %v186
    %v191 = vpack.c.bf16 %v189, %v187
    %v192 = vld [vmem:[#allocation4] sm:$0xff]
    %v193 = vld [vmem:[#allocation4 + $0x8] sm:$0xff]
    %v194 = vld [vmem:[#allocation4 + $0x10] sm:$0xff]
    %v195 = vld [vmem:[#allocation4 + $0x18] sm:$0xff]
    %v196 = vld [vmem:[#allocation4 + $0x20] sm:$0xff]
    %v197 = vld [vmem:[#allocation4 + $0x28] sm:$0xff]
    %v198 = vld [vmem:[#allocation4 + $0x30] sm:$0xff]
    %v199 = vld [vmem:[#allocation4 + $0x38] sm:$0xff]
    %v200 = vld [vmem:[#allocation4 + $0x40] sm:$0xff]
    %v201 = vld [vmem:[#allocation4 + $0x48] sm:$0xff]
    %v202 = vld [vmem:[#allocation4 + $0x50] sm:$0xff]
    %v203 = vld [vmem:[#allocation4 + $0x58] sm:$0xff]
    %v204 = vld [vmem:[#allocation4 + $0x60] sm:$0xff]
    %v205 = vld [vmem:[#allocation4 + $0x68] sm:$0xff]
    %v206 = vld [vmem:[#allocation4 + $0x70] sm:$0xff]
    %v207 = vld [vmem:[#allocation4 + $0x78] sm:$0xff]
    %v208 = vld [vmem:[#allocation4 + $0x80] sm:$0xff]
    %v209 = vld [vmem:[#allocation4 + $0x88] sm:$0xff]
    %v210 = vld [vmem:[#allocation4 + $0x90] sm:$0xff]
    %v211 = vld [vmem:[#allocation4 + $0x98] sm:$0xff]
    %v212 = vld [vmem:[#allocation4 + $0xa0] sm:$0xff]
    %v213 = vld [vmem:[#allocation4 + $0xa8] sm:$0xff]
    %v214 = vld [vmem:[#allocation4 + $0xb0] sm:$0xff]
    %v215 = vld [vmem:[#allocation4 + $0xb8] sm:$0xff]
    %v216 = vld [vmem:[#allocation4 + $0xc0] sm:$0xff]
    %v217 = vld [vmem:[#allocation4 + $0xc8] sm:$0xff]
    %v218 = vld [vmem:[#allocation4 + $0xd0] sm:$0xff]
    %v219 = vld [vmem:[#allocation4 + $0xd8] sm:$0xff]
    %v220 = vld [vmem:[#allocation4 + $0xe0] sm:$0xff]
    %v221 = vld [vmem:[#allocation4 + $0xe8] sm:$0xff]
    %v222 = vld [vmem:[#allocation4 + $0xf0] sm:$0xff]
    %v223 = vld [vmem:[#allocation4 + $0xf8] sm:$0xff]
    %v224 = vld [vmem:[#allocation4 + $0x100] sm:$0xff]
    %v225 = vld [vmem:[#allocation4 + $0x108] sm:$0xff]
    %v226 = vld [vmem:[#allocation4 + $0x110] sm:$0xff]
    %v227 = vld [vmem:[#allocation4 + $0x118] sm:$0xff]
    %v228 = vld [vmem:[#allocation4 + $0x120] sm:$0xff]
    %v229 = vld [vmem:[#allocation4 + $0x128] sm:$0xff]
    %v230 = vld [vmem:[#allocation4 + $0x130] sm:$0xff]
    %v231 = vld [vmem:[#allocation4 + $0x138] sm:$0xff]
    %v232 = vld [vmem:[#allocation4 + $0x140] sm:$0xff]
    %v233 = vld [vmem:[#allocation4 + $0x148] sm:$0xff]
    %v234 = vld [vmem:[#allocation4 + $0x150] sm:$0xff]
    %v235 = vld [vmem:[#allocation4 + $0x158] sm:$0xff]
    %v236 = vld [vmem:[#allocation4 + $0x160] sm:$0xff]
    %v237 = vld [vmem:[#allocation4 + $0x168] sm:$0xff]
    %v238 = vld [vmem:[#allocation4 + $0x170] sm:$0xff]
    %v239 = vld [vmem:[#allocation4 + $0x178] sm:$0xff]
    %v240 = vld [vmem:[#allocation4 + $0x180] sm:$0xff]
    %v241 = vld [vmem:[#allocation4 + $0x188] sm:$0xff]
    %v242 = vld [vmem:[#allocation4 + $0x190] sm:$0xff]
    %v243 = vld [vmem:[#allocation4 + $0x198] sm:$0xff]
    %v244 = vld [vmem:[#allocation4 + $0x1a0] sm:$0xff]
    %v245 = vld [vmem:[#allocation4 + $0x1a8] sm:$0xff]
    %v246 = vld [vmem:[#allocation4 + $0x1b0] sm:$0xff]
    %v247 = vld [vmem:[#allocation4 + $0x1b8] sm:$0xff]
    %v248 = vld [vmem:[#allocation4 + $0x1c0] sm:$0xff]
    %v249 = vld [vmem:[#allocation4 + $0x1c8] sm:$0xff]
    %v250 = vld [vmem:[#allocation4 + $0x1d0] sm:$0xff]
    %v251 = vld [vmem:[#allocation4 + $0x1d8] sm:$0xff]
    %v252 = vld [vmem:[#allocation4 + $0x1e0] sm:$0xff]
    %v253 = vld [vmem:[#allocation4 + $0x1e8] sm:$0xff]
    %v254 = vld [vmem:[#allocation4 + $0x1f0] sm:$0xff]
    %v255 = vld [vmem:[#allocation4 + $0x1f8] sm:$0xff]
    %v256 = vld [vmem:[%s4] sm:$0xf]
    %v258 = vperm.slane %v256, 0
    %v259 = vperm.slane %v256, 1
    %v260 = vperm.slane %v256, 2
    %v261 = vperm.slane %v256, 3
    %v330 = vunpack.c.l.b16 %v192
    %v331 = vunpack.c.h.b16 %v192
    %v332 = vunpack.c.l.b16 %v193
    %v333 = vunpack.c.h.b16 %v193
    %v334 = vunpack.c.l.b16 %v194
    %v335 = vunpack.c.h.b16 %v194
    %v336 = vunpack.c.l.b16 %v195
    %v337 = vunpack.c.h.b16 %v195
    %v338 = vunpack.c.l.b16 %v196
    %v339 = vunpack.c.h.b16 %v196
    %v340 = vunpack.c.l.b16 %v197
    %v341 = vunpack.c.h.b16 %v197
    %v342 = vunpack.c.l.b16 %v198
    %v343 = vunpack.c.h.b16 %v198
    %v344 = vunpack.c.l.b16 %v199
    %v345 = vunpack.c.h.b16 %v199
    %v346 = vunpack.c.l.b16 %v200
    %v347 = vunpack.c.h.b16 %v200
    %v348 = vunpack.c.l.b16 %v201
    %v349 = vunpack.c.h.b16 %v201
    %v350 = vunpack.c.l.b16 %v202
    %v351 = vunpack.c.h.b16 %v202
    %v352 = vunpack.c.l.b16 %v203
    %v353 = vunpack.c.h.b16 %v203
    %v354 = vunpack.c.l.b16 %v204
    %v355 = vunpack.c.h.b16 %v204
    %v356 = vunpack.c.l.b16 %v205
    %v357 = vunpack.c.h.b16 %v205
    %v358 = vunpack.c.l.b16 %v206
    %v359 = vunpack.c.h.b16 %v206
    %v360 = vunpack.c.l.b16 %v207
    %v361 = vunpack.c.h.b16 %v207
    %v362 = vunpack.c.l.b16 %v208
    %v363 = vunpack.c.h.b16 %v208
    %v364 = vunpack.c.l.b16 %v209
    %v365 = vunpack.c.h.b16 %v209
    %v366 = vunpack.c.l.b16 %v210
    %v367 = vunpack.c.h.b16 %v210
    %v368 = vunpack.c.l.b16 %v211
    %v369 = vunpack.c.h.b16 %v211
    %v370 = vunpack.c.l.b16 %v212
    %v371 = vunpack.c.h.b16 %v212
    %v372 = vunpack.c.l.b16 %v213
    %v373 = vunpack.c.h.b16 %v213
    %v374 = vunpack.c.l.b16 %v214
    %v375 = vunpack.c.h.b16 %v214
    %v376 = vunpack.c.l.b16 %v215
    %v377 = vunpack.c.h.b16 %v215
    %v378 = vunpack.c.l.b16 %v216
    %v379 = vunpack.c.h.b16 %v216
    %v380 = vunpack.c.l.b16 %v217
    %v381 = vunpack.c.h.b16 %v217
    %v382 = vunpack.c.l.b16 %v218
    %v383 = vunpack.c.h.b16 %v218
    %v384 = vunpack.c.l.b16 %v219
    %v385 = vunpack.c.h.b16 %v219
    %v386 = vunpack.c.l.b16 %v220
    %v387 = vunpack.c.h.b16 %v220
    %v388 = vunpack.c.l.b16 %v221
    %v389 = vunpack.c.h.b16 %v221
    %v390 = vunpack.c.l.b16 %v222
    %v391 = vunpack.c.h.b16 %v222
    %v392 = vunpack.c.l.b16 %v223
    %v393 = vunpack.c.h.b16 %v223
    %v394 = vunpack.c.l.b16 %v224
    %v395 = vunpack.c.h.b16 %v224
    %v396 = vunpack.c.l.b16 %v225
    %v397 = vunpack.c.h.b16 %v225
    %v398 = vunpack.c.l.b16 %v226
    %v399 = vunpack.c.h.b16 %v226
    %v400 = vunpack.c.l.b16 %v227
    %v401 = vunpack.c.h.b16 %v227
    %v402 = vunpack.c.l.b16 %v228
    %v403 = vunpack.c.h.b16 %v228
    %v404 = vunpack.c.l.b16 %v229
    %v405 = vunpack.c.h.b16 %v229
    %v406 = vunpack.c.l.b16 %v230
    %v407 = vunpack.c.h.b16 %v230
    %v408 = vunpack.c.l.b16 %v231
    %v409 = vunpack.c.h.b16 %v231
    %v410 = vunpack.c.l.b16 %v232
    %v411 = vunpack.c.h.b16 %v232
    %v412 = vunpack.c.l.b16 %v233
    %v413 = vunpack.c.h.b16 %v233
    %v414 = vunpack.c.l.b16 %v234
    %v415 = vunpack.c.h.b16 %v234
    %v416 = vunpack.c.l.b16 %v235
    %v417 = vunpack.c.h.b16 %v235
    %v418 = vunpack.c.l.b16 %v236
    %v419 = vunpack.c.h.b16 %v236
    %v420 = vunpack.c.l.b16 %v237
    %v421 = vunpack.c.h.b16 %v237
    %v422 = vunpack.c.l.b16 %v238
    %v423 = vunpack.c.h.b16 %v238
    %v424 = vunpack.c.l.b16 %v239
    %v425 = vunpack.c.h.b16 %v239
    %v426 = vunpack.c.l.b16 %v240
    %v427 = vunpack.c.h.b16 %v240
    %v428 = vunpack.c.l.b16 %v241
    %v429 = vunpack.c.h.b16 %v241
    %v430 = vunpack.c.l.b16 %v242
    %v431 = vunpack.c.h.b16 %v242
    %v432 = vunpack.c.l.b16 %v243
    %v433 = vunpack.c.h.b16 %v243
    %v434 = vunpack.c.l.b16 %v244
    %v435 = vunpack.c.h.b16 %v244
    %v436 = vunpack.c.l.b16 %v245
    %v437 = vunpack.c.h.b16 %v245
    %v438 = vunpack.c.l.b16 %v246
    %v439 = vunpack.c.h.b16 %v246
    %v440 = vunpack.c.l.b16 %v247
    %v441 = vunpack.c.h.b16 %v247
    %v442 = vunpack.c.l.b16 %v248
    %v443 = vunpack.c.h.b16 %v248
    %v444 = vunpack.c.l.b16 %v249
    %v445 = vunpack.c.h.b16 %v249
    %v446 = vunpack.c.l.b16 %v250
    %v447 = vunpack.c.h.b16 %v250
    %v448 = vunpack.c.l.b16 %v251
    %v449 = vunpack.c.h.b16 %v251
    %v450 = vunpack.c.l.b16 %v252
    %v451 = vunpack.c.h.b16 %v252
    %v452 = vunpack.c.l.b16 %v253
    %v453 = vunpack.c.h.b16 %v253
    %v454 = vunpack.c.l.b16 %v254
    %v455 = vunpack.c.h.b16 %v254
    %v456 = vunpack.c.l.b16 %v255
    %v457 = vunpack.c.h.b16 %v255
    %v458 = vpack.c.b16 %v334, %v330
    %v459 = vpack.c.b16 %v335, %v331
    %v460 = vpack.c.b16 %v336, %v332
    %v461 = vpack.c.b16 %v337, %v333
    %v462 = vpack.c.b16 %v342, %v338
    %v463 = vpack.c.b16 %v343, %v339
    %v464 = vpack.c.b16 %v344, %v340
    %v465 = vpack.c.b16 %v345, %v341
    %v466 = vpack.c.b16 %v350, %v346
    %v467 = vpack.c.b16 %v351, %v347
    %v468 = vpack.c.b16 %v352, %v348
    %v469 = vpack.c.b16 %v353, %v349
    %v470 = vpack.c.b16 %v358, %v354
    %v471 = vpack.c.b16 %v359, %v355
    %v472 = vpack.c.b16 %v360, %v356
    %v473 = vpack.c.b16 %v361, %v357
    %v474 = vpack.c.b16 %v366, %v362
    %v475 = vpack.c.b16 %v367, %v363
    %v476 = vpack.c.b16 %v368, %v364
    %v477 = vpack.c.b16 %v369, %v365
    %v478 = vpack.c.b16 %v374, %v370
    %v479 = vpack.c.b16 %v375, %v371
    %v480 = vpack.c.b16 %v376, %v372
    %v481 = vpack.c.b16 %v377, %v373
    %v482 = vpack.c.b16 %v382, %v378
    %v483 = vpack.c.b16 %v383, %v379
    %v484 = vpack.c.b16 %v384, %v380
    %v485 = vpack.c.b16 %v385, %v381
    %v486 = vpack.c.b16 %v390, %v386
    %v487 = vpack.c.b16 %v391, %v387
    %v488 = vpack.c.b16 %v392, %v388
    %v489 = vpack.c.b16 %v393, %v389
    %v490 = vpack.c.b16 %v398, %v394
    %v491 = vpack.c.b16 %v399, %v395
    %v492 = vpack.c.b16 %v400, %v396
    %v493 = vpack.c.b16 %v401, %v397
    %v494 = vpack.c.b16 %v406, %v402
    %v495 = vpack.c.b16 %v407, %v403
    %v496 = vpack.c.b16 %v408, %v404
    %v497 = vpack.c.b16 %v409, %v405
    %v498 = vpack.c.b16 %v414, %v410
    %v499 = vpack.c.b16 %v415, %v411
    %v500 = vpack.c.b16 %v416, %v412
    %v501 = vpack.c.b16 %v417, %v413
    %v502 = vpack.c.b16 %v422, %v418
    %v503 = vpack.c.b16 %v423, %v419
    %v504 = vpack.c.b16 %v424, %v420
    %v505 = vpack.c.b16 %v425, %v421
    %v506 = vpack.c.b16 %v430, %v426
    %v507 = vpack.c.b16 %v431, %v427
    %v508 = vpack.c.b16 %v432, %v428
    %v509 = vpack.c.b16 %v433, %v429
    %v510 = vpack.c.b16 %v438, %v434
    %v511 = vpack.c.b16 %v439, %v435
    %v512 = vpack.c.b16 %v440, %v436
    %v513 = vpack.c.b16 %v441, %v437
    %v514 = vpack.c.b16 %v446, %v442
    %v515 = vpack.c.b16 %v447, %v443
    %v516 = vpack.c.b16 %v448, %v444
    %v517 = vpack.c.b16 %v449, %v445
    %v518 = vpack.c.b16 %v454, %v450
    %v519 = vpack.c.b16 %v455, %v451
    %v520 = vpack.c.b16 %v456, %v452
    %v521 = vpack.c.b16 %v457, %v453
    %586 = vmatpush.bf16.msra.mxu0 %v486
    %587 = vmatpush.bf16.msra.mxu0 %v482
    %588 = vmatpush.bf16.msra.mxu0 %v478
    %589 = vmatpush.bf16.msra.mxu0 %v474
    %590 = vmatpush.bf16.msra.mxu0 %v470
    %591 = vmatpush.bf16.msra.mxu0 %v466
    %592 = vmatpush.bf16.msra.mxu0 %v462
    %593 = vmatpush.bf16.msra.mxu0 %v458
    %594 = vmatmul.bf16.gmra.mxu0 %v190
    %v595 = vpop.f32.mrf.mxu0
    %v596 = vadd.f32 %v258, %v595
    %v597 = vpop.f32.mrf.mxu0
    %v598 = vadd.f32 %v258, %v597
    %599 = vdwg.mxu0
    %600 = vmatpush.bf16.msra.mxu0 %v518
    %601 = vmatpush.bf16.msra.mxu0 %v514
    %602 = vmatpush.bf16.msra.mxu0 %v510
    %603 = vmatpush.bf16.msra.mxu0 %v506
    %604 = vmatpush.bf16.msra.mxu0 %v502
    %605 = vmatpush.bf16.msra.mxu0 %v498
    %606 = vmatpush.bf16.msra.mxu0 %v494
    %607 = vmatpush.bf16.msra.mxu0 %v490
    %608 = vmatmul.bf16.gmra.mxu0 %v191
    %v609 = vpop.f32.mrf.mxu0
    %v610 = vadd.f32 %v596, %v609
    %v611 = vpop.f32.mrf.mxu0
    %v612 = vadd.f32 %v598, %v611
    %613 = vdwg.mxu0
    %614 = vmatpush.bf16.msra.mxu0 %v487
    %615 = vmatpush.bf16.msra.mxu0 %v483
    %616 = vmatpush.bf16.msra.mxu0 %v479
    %617 = vmatpush.bf16.msra.mxu0 %v475
    %618 = vmatpush.bf16.msra.mxu0 %v471
    %619 = vmatpush.bf16.msra.mxu0 %v467
    %620 = vmatpush.bf16.msra.mxu0 %v463
    %621 = vmatpush.bf16.msra.mxu0 %v459
    %622 = vmatmul.bf16.gmra.mxu0 %v190
    %v623 = vpop.f32.mrf.mxu0
    %v624 = vadd.f32 %v259, %v623
    %v625 = vpop.f32.mrf.mxu0
    %v626 = vadd.f32 %v259, %v625
    %627 = vdwg.mxu0
    %628 = vmatpush.bf16.msra.mxu0 %v519
    %629 = vmatpush.bf16.msra.mxu0 %v515
    %630 = vmatpush.bf16.msra.mxu0 %v511
    %631 = vmatpush.bf16.msra.mxu0 %v507
    %632 = vmatpush.bf16.msra.mxu0 %v503
    %633 = vmatpush.bf16.msra.mxu0 %v499
    %634 = vmatpush.bf16.msra.mxu0 %v495
    %635 = vmatpush.bf16.msra.mxu0 %v491
    %636 = vmatmul.bf16.gmra.mxu0 %v191
    %v637 = vpop.f32.mrf.mxu0
    %v638 = vadd.f32 %v624, %v637
    %v639 = vpop.f32.mrf.mxu0
    %v640 = vadd.f32 %v626, %v639
    %641 = vdwg.mxu0
    %642 = vmatpush.bf16.msra.mxu0 %v488
    %643 = vmatpush.bf16.msra.mxu0 %v484
    %644 = vmatpush.bf16.msra.mxu0 %v480
    %645 = vmatpush.bf16.msra.mxu0 %v476
    %646 = vmatpush.bf16.msra.mxu0 %v472
    %647 = vmatpush.bf16.msra.mxu0 %v468
    %648 = vmatpush.bf16.msra.mxu0 %v464
    %649 = vmatpush.bf16.msra.mxu0 %v460
    %650 = vmatmul.bf16.gmra.mxu0 %v190
    %v651 = vpop.f32.mrf.mxu0
    %v652 = vadd.f32 %v260, %v651
    %v653 = vpop.f32.mrf.mxu0
    %v654 = vadd.f32 %v260, %v653
    %655 = vdwg.mxu0
    %656 = vmatpush.bf16.msra.mxu0 %v520
    %657 = vmatpush.bf16.msra.mxu0 %v516
    %658 = vmatpush.bf16.msra.mxu0 %v512
    %659 = vmatpush.bf16.msra.mxu0 %v508
    %660 = vmatpush.bf16.msra.mxu0 %v504
    %661 = vmatpush.bf16.msra.mxu0 %v500
    %662 = vmatpush.bf16.msra.mxu0 %v496
    %663 = vmatpush.bf16.msra.mxu0 %v492
    %664 = vmatmul.bf16.gmra.mxu0 %v191
    %v665 = vpop.f32.mrf.mxu0
    %v666 = vadd.f32 %v652, %v665
    %v667 = vpop.f32.mrf.mxu0
    %v668 = vadd.f32 %v654, %v667
    %669 = vdwg.mxu0
    %670 = vmatpush.bf16.msra.mxu0 %v489
    %671 = vmatpush.bf16.msra.mxu0 %v485
    %672 = vmatpush.bf16.msra.mxu0 %v481
    %673 = vmatpush.bf16.msra.mxu0 %v477
    %674 = vmatpush.bf16.msra.mxu0 %v473
    %675 = vmatpush.bf16.msra.mxu0 %v469
    %676 = vmatpush.bf16.msra.mxu0 %v465
    %677 = vmatpush.bf16.msra.mxu0 %v461
    %678 = vmatmul.bf16.gmra.mxu0 %v190
    %v679 = vpop.f32.mrf.mxu0
    %v680 = vadd.f32 %v261, %v679
    %v681 = vpop.f32.mrf.mxu0
    %v682 = vadd.f32 %v261, %v681
    %683 = vdwg.mxu0
    %684 = vmatpush.bf16.msra.mxu0 %v521
    %685 = vmatpush.bf16.msra.mxu0 %v517
    %686 = vmatpush.bf16.msra.mxu0 %v513
    %687 = vmatpush.bf16.msra.mxu0 %v509
    %688 = vmatpush.bf16.msra.mxu0 %v505
    %689 = vmatpush.bf16.msra.mxu0 %v501
    %690 = vmatpush.bf16.msra.mxu0 %v497
    %691 = vmatpush.bf16.msra.mxu0 %v493
    %692 = vmatmul.bf16.gmra.mxu0 %v191
    %v693 = vpop.f32.mrf.mxu0
    %v694 = vadd.f32 %v680, %v693
    %v695 = vpop.f32.mrf.mxu0
    %v696 = vadd.f32 %v682, %v695
    %697 = vdwg.mxu0
    %v698 = vmax.f32 %v610, 0.0
    %v699 = vmax.f32 %v638, 0.0
    %v700 = vmax.f32 %v666, 0.0
    %v701 = vmax.f32 %v694, 0.0
    %v702 = vmax.f32 %v612, 0.0
    %v703 = vmax.f32 %v640, 0.0
    %v704 = vmax.f32 %v668, 0.0
    %v705 = vmax.f32 %v696, 0.0
    %v706 = vpack.c.bf16 %v702, %v698
    %v707 = vpack.c.bf16 %v703, %v699
    %v708 = vpack.c.bf16 %v704, %v700
    %v709 = vpack.c.bf16 %v705, %v701
    %v710 = vld [vmem:[#allocation6] sm:$0xff]
    %v711 = vld [vmem:[#allocation6 + $0x8] sm:$0xff]
    %v712 = vld [vmem:[#allocation6 + $0x10] sm:$0xff]
    %v713 = vld [vmem:[#allocation6 + $0x18] sm:$0xff]
    %v714 = vld [vmem:[#allocation6 + $0x20] sm:$0xff]
    %v715 = vld [vmem:[#allocation6 + $0x28] sm:$0xff]
    %v716 = vld [vmem:[#allocation6 + $0x30] sm:$0xff]
    %v717 = vld [vmem:[#allocation6 + $0x38] sm:$0xff]
    %v718 = vld [vmem:[#allocation6 + $0x40] sm:$0xff]
    %v719 = vld [vmem:[#allocation6 + $0x48] sm:$0xff]
    %v720 = vld [vmem:[#allocation6 + $0x50] sm:$0xff]
    %v721 = vld [vmem:[#allocation6 + $0x58] sm:$0xff]
    %v722 = vld [vmem:[#allocation6 + $0x60] sm:$0xff]
    %v723 = vld [vmem:[#allocation6 + $0x68] sm:$0xff]
    %v724 = vld [vmem:[#allocation6 + $0x70] sm:$0xff]
    %v725 = vld [vmem:[#allocation6 + $0x78] sm:$0xff]
    %v726 = vld [vmem:[#allocation6 + $0x80] sm:$0xff]
    %v727 = vld [vmem:[#allocation6 + $0x88] sm:$0xff]
    %v728 = vld [vmem:[#allocation6 + $0x90] sm:$0xff]
    %v729 = vld [vmem:[#allocation6 + $0x98] sm:$0xff]
    %v730 = vld [vmem:[#allocation6 + $0xa0] sm:$0xff]
    %v731 = vld [vmem:[#allocation6 + $0xa8] sm:$0xff]
    %v732 = vld [vmem:[#allocation6 + $0xb0] sm:$0xff]
    %v733 = vld [vmem:[#allocation6 + $0xb8] sm:$0xff]
    %v734 = vld [vmem:[#allocation6 + $0xc0] sm:$0xff]
    %v735 = vld [vmem:[#allocation6 + $0xc8] sm:$0xff]
    %v736 = vld [vmem:[#allocation6 + $0xd0] sm:$0xff]
    %v737 = vld [vmem:[#allocation6 + $0xd8] sm:$0xff]
    %v738 = vld [vmem:[#allocation6 + $0xe0] sm:$0xff]
    %v739 = vld [vmem:[#allocation6 + $0xe8] sm:$0xff]
    %v740 = vld [vmem:[#allocation6 + $0xf0] sm:$0xff]
    %v741 = vld [vmem:[#allocation6 + $0xf8] sm:$0xff]
    %v742 = vld [vmem:[#allocation6 + $0x100] sm:$0xff]
    %v743 = vld [vmem:[#allocation6 + $0x108] sm:$0xff]
    %v744 = vld [vmem:[#allocation6 + $0x110] sm:$0xff]
    %v745 = vld [vmem:[#allocation6 + $0x118] sm:$0xff]
    %v746 = vld [vmem:[#allocation6 + $0x120] sm:$0xff]
    %v747 = vld [vmem:[#allocation6 + $0x128] sm:$0xff]
    %v748 = vld [vmem:[#allocation6 + $0x130] sm:$0xff]
    %v749 = vld [vmem:[#allocation6 + $0x138] sm:$0xff]
    %v750 = vld [vmem:[#allocation6 + $0x140] sm:$0xff]
    %v751 = vld [vmem:[#allocation6 + $0x148] sm:$0xff]
    %v752 = vld [vmem:[#allocation6 + $0x150] sm:$0xff]
    %v753 = vld [vmem:[#allocation6 + $0x158] sm:$0xff]
    %v754 = vld [vmem:[#allocation6 + $0x160] sm:$0xff]
    %v755 = vld [vmem:[#allocation6 + $0x168] sm:$0xff]
    %v756 = vld [vmem:[#allocation6 + $0x170] sm:$0xff]
    %v757 = vld [vmem:[#allocation6 + $0x178] sm:$0xff]
    %v758 = vld [vmem:[#allocation6 + $0x180] sm:$0xff]
    %v759 = vld [vmem:[#allocation6 + $0x188] sm:$0xff]
    %v760 = vld [vmem:[#allocation6 + $0x190] sm:$0xff]
    %v761 = vld [vmem:[#allocation6 + $0x198] sm:$0xff]
    %v762 = vld [vmem:[#allocation6 + $0x1a0] sm:$0xff]
    %v763 = vld [vmem:[#allocation6 + $0x1a8] sm:$0xff]
    %v764 = vld [vmem:[#allocation6 + $0x1b0] sm:$0xff]
    %v765 = vld [vmem:[#allocation6 + $0x1b8] sm:$0xff]
    %v766 = vld [vmem:[#allocation6 + $0x1c0] sm:$0xff]
    %v767 = vld [vmem:[#allocation6 + $0x1c8] sm:$0xff]
    %v768 = vld [vmem:[#allocation6 + $0x1d0] sm:$0xff]
    %v769 = vld [vmem:[#allocation6 + $0x1d8] sm:$0xff]
    %v770 = vld [vmem:[#allocation6 + $0x1e0] sm:$0xff]
    %v771 = vld [vmem:[#allocation6 + $0x1e8] sm:$0xff]
    %v772 = vld [vmem:[#allocation6 + $0x1f0] sm:$0xff]
    %v773 = vld [vmem:[#allocation6 + $0x1f8] sm:$0xff]
    %v774 = vld [vmem:[%s6] sm:$0x3]
    %v776 = vperm.slane %v774, 0
    %v777 = vperm.slane %v774, 1
    %v844 = vunpack.c.l.b16 %v710
    %v845 = vunpack.c.h.b16 %v710
    %v846 = vunpack.c.l.b16 %v711
    %v847 = vunpack.c.h.b16 %v711
    %v848 = vunpack.c.l.b16 %v712
    %v849 = vunpack.c.h.b16 %v712
    %v850 = vunpack.c.l.b16 %v713
    %v851 = vunpack.c.h.b16 %v713
    %v852 = vunpack.c.l.b16 %v714
    %v853 = vunpack.c.h.b16 %v714
    %v854 = vunpack.c.l.b16 %v715
    %v855 = vunpack.c.h.b16 %v715
    %v856 = vunpack.c.l.b16 %v716
    %v857 = vunpack.c.h.b16 %v716
    %v858 = vunpack.c.l.b16 %v717
    %v859 = vunpack.c.h.b16 %v717
    %v860 = vunpack.c.l.b16 %v718
    %v861 = vunpack.c.h.b16 %v718
    %v862 = vunpack.c.l.b16 %v719
    %v863 = vunpack.c.h.b16 %v719
    %v864 = vunpack.c.l.b16 %v720
    %v865 = vunpack.c.h.b16 %v720
    %v866 = vunpack.c.l.b16 %v721
    %v867 = vunpack.c.h.b16 %v721
    %v868 = vunpack.c.l.b16 %v722
    %v869 = vunpack.c.h.b16 %v722
    %v870 = vunpack.c.l.b16 %v723
    %v871 = vunpack.c.h.b16 %v723
    %v872 = vunpack.c.l.b16 %v724
    %v873 = vunpack.c.h.b16 %v724
    %v874 = vunpack.c.l.b16 %v725
    %v875 = vunpack.c.h.b16 %v725
    %v876 = vunpack.c.l.b16 %v726
    %v877 = vunpack.c.h.b16 %v726
    %v878 = vunpack.c.l.b16 %v727
    %v879 = vunpack.c.h.b16 %v727
    %v880 = vunpack.c.l.b16 %v728
    %v881 = vunpack.c.h.b16 %v728
    %v882 = vunpack.c.l.b16 %v729
    %v883 = vunpack.c.h.b16 %v729
    %v884 = vunpack.c.l.b16 %v730
    %v885 = vunpack.c.h.b16 %v730
    %v886 = vunpack.c.l.b16 %v731
    %v887 = vunpack.c.h.b16 %v731
    %v888 = vunpack.c.l.b16 %v732
    %v889 = vunpack.c.h.b16 %v732
    %v890 = vunpack.c.l.b16 %v733
    %v891 = vunpack.c.h.b16 %v733
    %v892 = vunpack.c.l.b16 %v734
    %v893 = vunpack.c.h.b16 %v734
    %v894 = vunpack.c.l.b16 %v735
    %v895 = vunpack.c.h.b16 %v735
    %v896 = vunpack.c.l.b16 %v736
    %v897 = vunpack.c.h.b16 %v736
    %v898 = vunpack.c.l.b16 %v737
    %v899 = vunpack.c.h.b16 %v737
    %v900 = vunpack.c.l.b16 %v738
    %v901 = vunpack.c.h.b16 %v738
    %v902 = vunpack.c.l.b16 %v739
    %v903 = vunpack.c.h.b16 %v739
    %v904 = vunpack.c.l.b16 %v740
    %v905 = vunpack.c.h.b16 %v740
    %v906 = vunpack.c.l.b16 %v741
    %v907 = vunpack.c.h.b16 %v741
    %v908 = vunpack.c.l.b16 %v742
    %v909 = vunpack.c.h.b16 %v742
    %v910 = vunpack.c.l.b16 %v743
    %v911 = vunpack.c.h.b16 %v743
    %v912 = vunpack.c.l.b16 %v744
    %v913 = vunpack.c.h.b16 %v744
    %v914 = vunpack.c.l.b16 %v745
    %v915 = vunpack.c.h.b16 %v745
    %v916 = vunpack.c.l.b16 %v746
    %v917 = vunpack.c.h.b16 %v746
    %v918 = vunpack.c.l.b16 %v747
    %v919 = vunpack.c.h.b16 %v747
    %v920 = vunpack.c.l.b16 %v748
    %v921 = vunpack.c.h.b16 %v748
    %v922 = vunpack.c.l.b16 %v749
    %v923 = vunpack.c.h.b16 %v749
    %v924 = vunpack.c.l.b16 %v750
    %v925 = vunpack.c.h.b16 %v750
    %v926 = vunpack.c.l.b16 %v751
    %v927 = vunpack.c.h.b16 %v751
    %v928 = vunpack.c.l.b16 %v752
    %v929 = vunpack.c.h.b16 %v752
    %v930 = vunpack.c.l.b16 %v753
    %v931 = vunpack.c.h.b16 %v753
    %v932 = vunpack.c.l.b16 %v754
    %v933 = vunpack.c.h.b16 %v754
    %v934 = vunpack.c.l.b16 %v755
    %v935 = vunpack.c.h.b16 %v755
    %v936 = vunpack.c.l.b16 %v756
    %v937 = vunpack.c.h.b16 %v756
    %v938 = vunpack.c.l.b16 %v757
    %v939 = vunpack.c.h.b16 %v757
    %v940 = vunpack.c.l.b16 %v758
    %v941 = vunpack.c.h.b16 %v758
    %v942 = vunpack.c.l.b16 %v759
    %v943 = vunpack.c.h.b16 %v759
    %v944 = vunpack.c.l.b16 %v760
    %v945 = vunpack.c.h.b16 %v760
    %v946 = vunpack.c.l.b16 %v761
    %v947 = vunpack.c.h.b16 %v761
    %v948 = vunpack.c.l.b16 %v762
    %v949 = vunpack.c.h.b16 %v762
    %v950 = vunpack.c.l.b16 %v763
    %v951 = vunpack.c.h.b16 %v763
    %v952 = vunpack.c.l.b16 %v764
    %v953 = vunpack.c.h.b16 %v764
    %v954 = vunpack.c.l.b16 %v765
    %v955 = vunpack.c.h.b16 %v765
    %v956 = vunpack.c.l.b16 %v766
    %v957 = vunpack.c.h.b16 %v766
    %v958 = vunpack.c.l.b16 %v767
    %v959 = vunpack.c.h.b16 %v767
    %v960 = vunpack.c.l.b16 %v768
    %v961 = vunpack.c.h.b16 %v768
    %v962 = vunpack.c.l.b16 %v769
    %v963 = vunpack.c.h.b16 %v769
    %v964 = vunpack.c.l.b16 %v770
    %v965 = vunpack.c.h.b16 %v770
    %v966 = vunpack.c.l.b16 %v771
    %v967 = vunpack.c.h.b16 %v771
    %v968 = vunpack.c.l.b16 %v772
    %v969 = vunpack.c.h.b16 %v772
    %v970 = vunpack.c.l.b16 %v773
    %v971 = vunpack.c.h.b16 %v773
    %v972 = vpack.c.b16 %v846, %v844
    %v973 = vpack.c.b16 %v847, %v845
    %v974 = vpack.c.b16 %v850, %v848
    %v975 = vpack.c.b16 %v851, %v849
    %v976 = vpack.c.b16 %v854, %v852
    %v977 = vpack.c.b16 %v855, %v853
    %v978 = vpack.c.b16 %v858, %v856
    %v979 = vpack.c.b16 %v859, %v857
    %v980 = vpack.c.b16 %v862, %v860
    %v981 = vpack.c.b16 %v863, %v861
    %v982 = vpack.c.b16 %v866, %v864
    %v983 = vpack.c.b16 %v867, %v865
    %v984 = vpack.c.b16 %v870, %v868
    %v985 = vpack.c.b16 %v871, %v869
    %v986 = vpack.c.b16 %v874, %v872
    %v987 = vpack.c.b16 %v875, %v873
    %v988 = vpack.c.b16 %v878, %v876
    %v989 = vpack.c.b16 %v879, %v877
    %v990 = vpack.c.b16 %v882, %v880
    %v991 = vpack.c.b16 %v883, %v881
    %v992 = vpack.c.b16 %v886, %v884
    %v993 = vpack.c.b16 %v887, %v885
    %v994 = vpack.c.b16 %v890, %v888
    %v995 = vpack.c.b16 %v891, %v889
    %v996 = vpack.c.b16 %v894, %v892
    %v997 = vpack.c.b16 %v895, %v893
    %v998 = vpack.c.b16 %v898, %v896
    %v999 = vpack.c.b16 %v899, %v897
    %v1000 = vpack.c.b16 %v902, %v900
    %v1001 = vpack.c.b16 %v903, %v901
    %v1002 = vpack.c.b16 %v906, %v904
    %v1003 = vpack.c.b16 %v907, %v905
    %v1004 = vpack.c.b16 %v910, %v908
    %v1005 = vpack.c.b16 %v911, %v909
    %v1006 = vpack.c.b16 %v914, %v912
    %v1007 = vpack.c.b16 %v915, %v913
    %v1008 = vpack.c.b16 %v918, %v916
    %v1009 = vpack.c.b16 %v919, %v917
    %v1010 = vpack.c.b16 %v922, %v920
    %v1011 = vpack.c.b16 %v923, %v921
    %v1012 = vpack.c.b16 %v926, %v924
    %v1013 = vpack.c.b16 %v927, %v925
    %v1014 = vpack.c.b16 %v930, %v928
    %v1015 = vpack.c.b16 %v931, %v929
    %v1016 = vpack.c.b16 %v934, %v932
    %v1017 = vpack.c.b16 %v935, %v933
    %v1018 = vpack.c.b16 %v938, %v936
    %v1019 = vpack.c.b16 %v939, %v937
    %v1020 = vpack.c.b16 %v942, %v940
    %v1021 = vpack.c.b16 %v943, %v941
    %v1022 = vpack.c.b16 %v946, %v944
    %v1023 = vpack.c.b16 %v947, %v945
    %v1024 = vpack.c.b16 %v950, %v948
    %v1025 = vpack.c.b16 %v951, %v949
    %v1026 = vpack.c.b16 %v954, %v952
    %v1027 = vpack.c.b16 %v955, %v953
    %v1028 = vpack.c.b16 %v958, %v956
    %v1029 = vpack.c.b16 %v959, %v957
    %v1030 = vpack.c.b16 %v962, %v960
    %v1031 = vpack.c.b16 %v963, %v961
    %v1032 = vpack.c.b16 %v966, %v964
    %v1033 = vpack.c.b16 %v967, %v965
    %v1034 = vpack.c.b16 %v970, %v968
    %v1035 = vpack.c.b16 %v971, %v969
    %1100 = vmatpush.bf16.msra.mxu0 %v986
    %1101 = vmatpush.bf16.msra.mxu0 %v984
    %1102 = vmatpush.bf16.msra.mxu0 %v982
    %1103 = vmatpush.bf16.msra.mxu0 %v980
    %1104 = vmatpush.bf16.msra.mxu0 %v978
    %1105 = vmatpush.bf16.msra.mxu0 %v976
    %1106 = vmatpush.bf16.msra.mxu0 %v974
    %1107 = vmatpush.bf16.msra.mxu0 %v972
    %1108 = vmatmul.bf16.gmra.mxu0 %v706
    %v1109 = vpop.f32.mrf.mxu0
    %v1110 = vadd.f32 %v776, %v1109
    %v1111 = vpop.f32.mrf.mxu0
    %v1112 = vadd.f32 %v776, %v1111
    %1113 = vdwg.mxu0
    %1114 = vmatpush.bf16.msra.mxu0 %v1002
    %1115 = vmatpush.bf16.msra.mxu0 %v1000
    %1116 = vmatpush.bf16.msra.mxu0 %v998
    %1117 = vmatpush.bf16.msra.mxu0 %v996
    %1118 = vmatpush.bf16.msra.mxu0 %v994
    %1119 = vmatpush.bf16.msra.mxu0 %v992
    %1120 = vmatpush.bf16.msra.mxu0 %v990
    %1121 = vmatpush.bf16.msra.mxu0 %v988
    %1122 = vmatmul.bf16.gmra.mxu0 %v707
    %v1123 = vpop.f32.mrf.mxu0
    %v1124 = vadd.f32 %v1110, %v1123
    %v1125 = vpop.f32.mrf.mxu0
    %v1126 = vadd.f32 %v1112, %v1125
    %1127 = vdwg.mxu0
    %1128 = vmatpush.bf16.msra.mxu0 %v1018
    %1129 = vmatpush.bf16.msra.mxu0 %v1016
    %1130 = vmatpush.bf16.msra.mxu0 %v1014
    %1131 = vmatpush.bf16.msra.mxu0 %v1012
    %1132 = vmatpush.bf16.msra.mxu0 %v1010
    %1133 = vmatpush.bf16.msra.mxu0 %v1008
    %1134 = vmatpush.bf16.msra.mxu0 %v1006
    %1135 = vmatpush.bf16.msra.mxu0 %v1004
    %1136 = vmatmul.bf16.gmra.mxu0 %v708
    %v1137 = vpop.f32.mrf.mxu0
    %v1138 = vadd.f32 %v1124, %v1137
    %v1139 = vpop.f32.mrf.mxu0
    %v1140 = vadd.f32 %v1126, %v1139
    %1141 = vdwg.mxu0
    %1142 = vmatpush.bf16.msra.mxu0 %v1034
    %1143 = vmatpush.bf16.msra.mxu0 %v1032
    %1144 = vmatpush.bf16.msra.mxu0 %v1030
    %1145 = vmatpush.bf16.msra.mxu0 %v1028
    %1146 = vmatpush.bf16.msra.mxu0 %v1026
    %1147 = vmatpush.bf16.msra.mxu0 %v1024
    %1148 = vmatpush.bf16.msra.mxu0 %v1022
    %1149 = vmatpush.bf16.msra.mxu0 %v1020
    %1150 = vmatmul.bf16.gmra.mxu0 %v709
    %v1151 = vpop.f32.mrf.mxu0
    %v1152 = vadd.f32 %v1138, %v1151
    %v1153 = vpop.f32.mrf.mxu0
    %v1154 = vadd.f32 %v1140, %v1153
    %1155 = vdwg.mxu0
    %1156 = vmatpush.bf16.msra.mxu0 %v987
    %1157 = vmatpush.bf16.msra.mxu0 %v985
    %1158 = vmatpush.bf16.msra.mxu0 %v983
    %1159 = vmatpush.bf16.msra.mxu0 %v981
    %1160 = vmatpush.bf16.msra.mxu0 %v979
    %1161 = vmatpush.bf16.msra.mxu0 %v977
    %1162 = vmatpush.bf16.msra.mxu0 %v975
    %1163 = vmatpush.bf16.msra.mxu0 %v973
    %1164 = vmatmul.bf16.gmra.mxu0 %v706
    %v1165 = vpop.f32.mrf.mxu0
    %v1166 = vadd.f32 %v777, %v1165
    %v1167 = vpop.f32.mrf.mxu0
    %v1168 = vadd.f32 %v777, %v1167
    %1169 = vdwg.mxu0
    %1170 = vmatpush.bf16.msra.mxu0 %v1003
    %1171 = vmatpush.bf16.msra.mxu0 %v1001
    %1172 = vmatpush.bf16.msra.mxu0 %v999
    %1173 = vmatpush.bf16.msra.mxu0 %v997
    %1174 = vmatpush.bf16.msra.mxu0 %v995
    %1175 = vmatpush.bf16.msra.mxu0 %v993
    %1176 = vmatpush.bf16.msra.mxu0 %v991
    %1177 = vmatpush.bf16.msra.mxu0 %v989
    %1178 = vmatmul.bf16.gmra.mxu0 %v707
    %v1179 = vpop.f32.mrf.mxu0
    %v1180 = vadd.f32 %v1166, %v1179
    %v1181 = vpop.f32.mrf.mxu0
    %v1182 = vadd.f32 %v1168, %v1181
    %1183 = vdwg.mxu0
    %1184 = vmatpush.bf16.msra.mxu0 %v1019
    %1185 = vmatpush.bf16.msra.mxu0 %v1017
    %1186 = vmatpush.bf16.msra.mxu0 %v1015
    %1187 = vmatpush.bf16.msra.mxu0 %v1013
    %1188 = vmatpush.bf16.msra.mxu0 %v1011
    %1189 = vmatpush.bf16.msra.mxu0 %v1009
    %1190 = vmatpush.bf16.msra.mxu0 %v1007
    %1191 = vmatpush.bf16.msra.mxu0 %v1005
    %1192 = vmatmul.bf16.gmra.mxu0 %v708
    %v1193 = vpop.f32.mrf.mxu0
    %v1194 = vadd.f32 %v1180, %v1193
    %v1195 = vpop.f32.mrf.mxu0
    %v1196 = vadd.f32 %v1182, %v1195
    %1197 = vdwg.mxu0
    %1198 = vmatpush.bf16.msra.mxu0 %v1035
    %1199 = vmatpush.bf16.msra.mxu0 %v1033
    %1200 = vmatpush.bf16.msra.mxu0 %v1031
    %1201 = vmatpush.bf16.msra.mxu0 %v1029
    %1202 = vmatpush.bf16.msra.mxu0 %v1027
    %1203 = vmatpush.bf16.msra.mxu0 %v1025
    %1204 = vmatpush.bf16.msra.mxu0 %v1023
    %1205 = vmatpush.bf16.msra.mxu0 %v1021
    %1206 = vmatmul.bf16.gmra.mxu0 %v709
    %v1207 = vpop.f32.mrf.mxu0
    %v1208 = vadd.f32 %v1194, %v1207
    %v1209 = vpop.f32.mrf.mxu0
    %v1210 = vadd.f32 %v1196, %v1209
    %1211 = vdwg.mxu0
    %v1212 = vmax.f32 %v1152, 0.0
    %v1213 = vmax.f32 %v1208, 0.0
    %v1214 = vmax.f32 %v1154, 0.0
    %v1215 = vmax.f32 %v1210, 0.0
    %v1216 = vpack.c.bf16 %v1214, %v1212
    %v1217 = vpack.c.bf16 %v1215, %v1213
    %v1218 = vld [vmem:[#allocation7] sm:$0xf]
    %v1219 = vld [vmem:[#allocation7 + $0x4] sm:$0xf]
    %v1220 = vld [vmem:[#allocation7 + $0x8] sm:$0xf]
    %v1221 = vld [vmem:[#allocation7 + $0xc] sm:$0xf]
    %v1222 = vld [vmem:[#allocation7 + $0x10] sm:$0xf]
    %v1223 = vld [vmem:[#allocation7 + $0x14] sm:$0xf]
    %v1224 = vld [vmem:[#allocation7 + $0x18] sm:$0xf]
    %v1225 = vld [vmem:[#allocation7 + $0x1c] sm:$0xf]
    %v1226 = vld [vmem:[#allocation7 + $0x20] sm:$0xf]
    %v1227 = vld [vmem:[#allocation7 + $0x24] sm:$0xf]
    %v1228 = vld [vmem:[#allocation7 + $0x28] sm:$0xf]
    %v1229 = vld [vmem:[#allocation7 + $0x2c] sm:$0xf]
    %v1230 = vld [vmem:[#allocation7 + $0x30] sm:$0xf]
    %v1231 = vld [vmem:[#allocation7 + $0x34] sm:$0xf]
    %v1232 = vld [vmem:[#allocation7 + $0x38] sm:$0xf]
    %v1233 = vld [vmem:[#allocation7 + $0x3c] sm:$0xf]
    %v1234 = vld [vmem:[#allocation7 + $0x40] sm:$0xf]
    %v1235 = vld [vmem:[#allocation7 + $0x44] sm:$0xf]
    %v1236 = vld [vmem:[#allocation7 + $0x48] sm:$0xf]
    %v1237 = vld [vmem:[#allocation7 + $0x4c] sm:$0xf]
    %v1238 = vld [vmem:[#allocation7 + $0x50] sm:$0xf]
    %v1239 = vld [vmem:[#allocation7 + $0x54] sm:$0xf]
    %v1240 = vld [vmem:[#allocation7 + $0x58] sm:$0xf]
    %v1241 = vld [vmem:[#allocation7 + $0x5c] sm:$0xf]
    %v1242 = vld [vmem:[#allocation7 + $0x60] sm:$0xf]
    %v1243 = vld [vmem:[#allocation7 + $0x64] sm:$0xf]
    %v1244 = vld [vmem:[#allocation7 + $0x68] sm:$0xf]
    %v1245 = vld [vmem:[#allocation7 + $0x6c] sm:$0xf]
    %v1246 = vld [vmem:[#allocation7 + $0x70] sm:$0xf]
    %v1247 = vld [vmem:[#allocation7 + $0x74] sm:$0xf]
    %v1248 = vld [vmem:[#allocation7 + $0x78] sm:$0xf]
    %v1249 = vld [vmem:[#allocation7 + $0x7c] sm:$0xf]
    %v1250 = vld [vmem:[%s8] sm:$0x1]
    %v1252 = vperm.slane %v1250, 0
    %v1286 = vunpack.c.l.b16 %v1218
    %v1287 = vunpack.c.l.b16 %v1219
    %v1288 = vunpack.c.l.b16 %v1220
    %v1289 = vunpack.c.l.b16 %v1221
    %v1290 = vunpack.c.l.b16 %v1222
    %v1291 = vunpack.c.l.b16 %v1223
    %v1292 = vunpack.c.l.b16 %v1224
    %v1293 = vunpack.c.l.b16 %v1225
    %v1294 = vunpack.c.l.b16 %v1226
    %v1295 = vunpack.c.l.b16 %v1227
    %v1296 = vunpack.c.l.b16 %v1228
    %v1297 = vunpack.c.l.b16 %v1229
    %v1298 = vunpack.c.l.b16 %v1230
    %v1299 = vunpack.c.l.b16 %v1231
    %v1300 = vunpack.c.l.b16 %v1232
    %v1301 = vunpack.c.l.b16 %v1233
    %v1302 = vunpack.c.l.b16 %v1234
    %v1303 = vunpack.c.l.b16 %v1235
    %v1304 = vunpack.c.l.b16 %v1236
    %v1305 = vunpack.c.l.b16 %v1237
    %v1306 = vunpack.c.l.b16 %v1238
    %v1307 = vunpack.c.l.b16 %v1239
    %v1308 = vunpack.c.l.b16 %v1240
    %v1309 = vunpack.c.l.b16 %v1241
    %v1310 = vunpack.c.l.b16 %v1242
    %v1311 = vunpack.c.l.b16 %v1243
    %v1312 = vunpack.c.l.b16 %v1244
    %v1313 = vunpack.c.l.b16 %v1245
    %v1314 = vunpack.c.l.b16 %v1246
    %v1315 = vunpack.c.l.b16 %v1247
    %v1316 = vunpack.c.l.b16 %v1248
    %v1317 = vunpack.c.l.b16 %v1249
    %v1318 = vpack.c.b16 %v1287, %v1286
    %v1319 = vpack.c.b16 %v1289, %v1288
    %v1320 = vpack.c.b16 %v1291, %v1290
    %v1321 = vpack.c.b16 %v1293, %v1292
    %v1322 = vpack.c.b16 %v1295, %v1294
    %v1323 = vpack.c.b16 %v1297, %v1296
    %v1324 = vpack.c.b16 %v1299, %v1298
    %v1325 = vpack.c.b16 %v1301, %v1300
    %v1326 = vpack.c.b16 %v1303, %v1302
    %v1327 = vpack.c.b16 %v1305, %v1304
    %v1328 = vpack.c.b16 %v1307, %v1306
    %v1329 = vpack.c.b16 %v1309, %v1308
    %v1330 = vpack.c.b16 %v1311, %v1310
    %v1331 = vpack.c.b16 %v1313, %v1312
    %v1332 = vpack.c.b16 %v1315, %v1314
    %v1333 = vpack.c.b16 %v1317, %v1316
    %1350 = vmatpush.bf16.msra.mxu0 %v1325
    %1351 = vmatpush.bf16.msra.mxu0 %v1324
    %1352 = vmatpush.bf16.msra.mxu0 %v1323
    %1353 = vmatpush.bf16.msra.mxu0 %v1322
    %1354 = vmatpush.bf16.msra.mxu0 %v1321
    %1355 = vmatpush.bf16.msra.mxu0 %v1320
    %1356 = vmatpush.bf16.msra.mxu0 %v1319
    %1357 = vmatpush.bf16.msra.mxu0 %v1318
    %1358 = vmatmul.bf16.gmra.mxu0 %v1216
    %v1359 = vpop.f32.mrf.mxu0
    %v1360 = vadd.f32 %v1252, %v1359
    %v1361 = vpop.f32.mrf.mxu0
    %v1362 = vadd.f32 %v1252, %v1361
    %1363 = vdwg.mxu0
    %1364 = vmatpush.bf16.msra.mxu0 %v1333
    %1365 = vmatpush.bf16.msra.mxu0 %v1332
    %1366 = vmatpush.bf16.msra.mxu0 %v1331
    %1367 = vmatpush.bf16.msra.mxu0 %v1330
    %1368 = vmatpush.bf16.msra.mxu0 %v1329
    %1369 = vmatpush.bf16.msra.mxu0 %v1328
    %1370 = vmatpush.bf16.msra.mxu0 %v1327
    %1371 = vmatpush.bf16.msra.mxu0 %v1326
    %1372 = vmatmul.bf16.gmra.mxu0 %v1217
    %v1373 = vpop.f32.mrf.mxu0
    %v1374 = vadd.f32 %v1360, %v1373
    %v1375 = vpop.f32.mrf.mxu0
    %v1376 = vadd.f32 %v1362, %v1375
    %1377 = vdwg.mxu0
    %v1378 = vmax.f32 %v1374, 0.0
    %v1379 = vmax.f32 %v1376, 0.0
    %v1380 = vpack.c.bf16 %v1379, %v1378
    %v1381 = vld [vmem:[#allocation9] sm:$0xff]
    %v1382 = vld [vmem:[#allocation9 + $0x8] sm:$0xff]
    %v1383 = vld [vmem:[#allocation9 + $0x10] sm:$0xff]
    %v1384 = vld [vmem:[#allocation9 + $0x18] sm:$0xff]
    %v1385 = vld [vmem:[#allocation9 + $0x20] sm:$0xff]
    %v1386 = vld [vmem:[#allocation9 + $0x28] sm:$0xff]
    %v1387 = vld [vmem:[#allocation9 + $0x30] sm:$0xff]
    %v1388 = vld [vmem:[#allocation9 + $0x38] sm:$0xff]
    %v1389 = vld [vmem:[#allocation9 + $0x40] sm:$0xff]
    %v1390 = vld [vmem:[#allocation9 + $0x48] sm:$0xff]
    %v1391 = vld [vmem:[#allocation9 + $0x50] sm:$0xff]
    %v1392 = vld [vmem:[#allocation9 + $0x58] sm:$0xff]
    %v1393 = vld [vmem:[#allocation9 + $0x60] sm:$0xff]
    %v1394 = vld [vmem:[#allocation9 + $0x68] sm:$0xff]
    %v1395 = vld [vmem:[#allocation9 + $0x70] sm:$0xff]
    %v1396 = vld [vmem:[#allocation9 + $0x78] sm:$0xff]
    %v1397 = vld [vmem:[#allocation9 + $0x80] sm:$0xff]
    %v1398 = vld [vmem:[#allocation9 + $0x88] sm:$0xff]
    %v1399 = vld [vmem:[#allocation9 + $0x90] sm:$0xff]
    %v1400 = vld [vmem:[#allocation9 + $0x98] sm:$0xff]
    %v1401 = vld [vmem:[#allocation9 + $0xa0] sm:$0xff]
    %v1402 = vld [vmem:[#allocation9 + $0xa8] sm:$0xff]
    %v1403 = vld [vmem:[#allocation9 + $0xb0] sm:$0xff]
    %v1404 = vld [vmem:[#allocation9 + $0xb8] sm:$0xff]
    %v1405 = vld [vmem:[#allocation9 + $0xc0] sm:$0xff]
    %v1406 = vld [vmem:[#allocation9 + $0xc8] sm:$0xff]
    %v1407 = vld [vmem:[#allocation9 + $0xd0] sm:$0xff]
    %v1408 = vld [vmem:[#allocation9 + $0xd8] sm:$0xff]
    %v1409 = vld [vmem:[#allocation9 + $0xe0] sm:$0xff]
    %v1410 = vld [vmem:[#allocation9 + $0xe8] sm:$0xff]
    %v1411 = vld [vmem:[#allocation9 + $0xf0] sm:$0xff]
    %v1412 = vld [vmem:[#allocation9 + $0xf8] sm:$0xff]
    %v1413 = vld [vmem:[#allocation9 + $0x100] sm:$0xff]
    %v1414 = vld [vmem:[#allocation9 + $0x108] sm:$0xff]
    %v1415 = vld [vmem:[#allocation9 + $0x110] sm:$0xff]
    %v1416 = vld [vmem:[#allocation9 + $0x118] sm:$0xff]
    %v1417 = vld [vmem:[#allocation9 + $0x120] sm:$0xff]
    %v1418 = vld [vmem:[#allocation9 + $0x128] sm:$0xff]
    %v1419 = vld [vmem:[#allocation9 + $0x130] sm:$0xff]
    %v1420 = vld [vmem:[#allocation9 + $0x138] sm:$0xff]
    %v1421 = vld [vmem:[#allocation9 + $0x140] sm:$0xff]
    %v1422 = vld [vmem:[#allocation9 + $0x148] sm:$0xff]
    %v1423 = vld [vmem:[#allocation9 + $0x150] sm:$0xff]
    %v1424 = vld [vmem:[#allocation9 + $0x158] sm:$0xff]
    %v1425 = vld [vmem:[#allocation9 + $0x160] sm:$0xff]
    %v1426 = vld [vmem:[#allocation9 + $0x168] sm:$0xff]
    %v1427 = vld [vmem:[#allocation9 + $0x170] sm:$0xff]
    %v1428 = vld [vmem:[#allocation9 + $0x178] sm:$0xff]
    %v1429 = vld [vmem:[#allocation9 + $0x180] sm:$0xff]
    %v1430 = vld [vmem:[#allocation9 + $0x188] sm:$0xff]
    %v1431 = vld [vmem:[#allocation9 + $0x190] sm:$0xff]
    %v1432 = vld [vmem:[#allocation9 + $0x198] sm:$0xff]
    %v1433 = vld [vmem:[#allocation9 + $0x1a0] sm:$0xff]
    %v1434 = vld [vmem:[#allocation9 + $0x1a8] sm:$0xff]
    %v1435 = vld [vmem:[#allocation9 + $0x1b0] sm:$0xff]
    %v1436 = vld [vmem:[#allocation9 + $0x1b8] sm:$0xff]
    %v1437 = vld [vmem:[#allocation9 + $0x1c0] sm:$0xff]
    %v1438 = vld [vmem:[#allocation9 + $0x1c8] sm:$0xff]
    %v1439 = vld [vmem:[#allocation9 + $0x1d0] sm:$0xff]
    %v1440 = vld [vmem:[#allocation9 + $0x1d8] sm:$0xff]
    %v1441 = vld [vmem:[#allocation9 + $0x1e0] sm:$0xff]
    %v1442 = vld [vmem:[#allocation9 + $0x1e8] sm:$0xff]
    %v1443 = vld [vmem:[#allocation9 + $0x1f0] sm:$0xff]
    %v1444 = vld [vmem:[#allocation9 + $0x1f8] sm:$0xff]
    %v1445 = vld [vmem:[#allocation9 + $0x200] sm:$0xff]
    %v1446 = vld [vmem:[#allocation9 + $0x208] sm:$0xff]
    %v1447 = vld [vmem:[#allocation9 + $0x210] sm:$0xff]
    %v1448 = vld [vmem:[#allocation9 + $0x218] sm:$0xff]
    %v1449 = vld [vmem:[#allocation9 + $0x220] sm:$0xff]
    %v1450 = vld [vmem:[#allocation9 + $0x228] sm:$0xff]
    %v1451 = vld [vmem:[#allocation9 + $0x230] sm:$0xff]
    %v1452 = vld [vmem:[#allocation9 + $0x238] sm:$0xff]
    %v1453 = vld [vmem:[#allocation9 + $0x240] sm:$0xff]
    %v1454 = vld [vmem:[#allocation9 + $0x248] sm:$0xff]
    %v1455 = vld [vmem:[#allocation9 + $0x250] sm:$0xff]
    %v1456 = vld [vmem:[#allocation9 + $0x258] sm:$0xff]
    %v1457 = vld [vmem:[#allocation9 + $0x260] sm:$0xff]
    %v1458 = vld [vmem:[#allocation9 + $0x268] sm:$0xff]
    %v1459 = vld [vmem:[#allocation9 + $0x270] sm:$0xff]
    %v1460 = vld [vmem:[#allocation9 + $0x278] sm:$0xff]
    %v1461 = vld [vmem:[%s10] sm:$0xff]
    %v1462 = vld [vmem:[%s10 + $0x8] sm:$0x3]
    %v1465 = vperm.slane %v1461, 0
    %v1466 = vperm.slane %v1461, 1
    %v1467 = vperm.slane %v1461, 2
    %v1468 = vperm.slane %v1461, 3
    %v1469 = vperm.slane %v1461, 4
    %v1470 = vperm.slane %v1461, 5
    %v1471 = vperm.slane %v1461, 6
    %v1472 = vperm.slane %v1461, 7
    %v1473 = vperm.slane %v1462, 0
    %v1474 = vperm.slane %v1462, 1
    %v1565 = vunpack.c.l.b16 %v1381
    %v1566 = vunpack.c.h.b16 %v1381
    %v1567 = vunpack.c.l.b16 %v1382
    %v1568 = vunpack.c.h.b16 %v1382
    %v1569 = vunpack.c.l.b16 %v1383
    %v1570 = vunpack.c.h.b16 %v1383
    %v1571 = vunpack.c.l.b16 %v1384
    %v1572 = vunpack.c.h.b16 %v1384
    %v1573 = vunpack.c.l.b16 %v1385
    %v1574 = vunpack.c.h.b16 %v1385
    %v1575 = vunpack.c.l.b16 %v1386
    %v1576 = vunpack.c.h.b16 %v1386
    %v1577 = vunpack.c.l.b16 %v1387
    %v1578 = vunpack.c.h.b16 %v1387
    %v1579 = vunpack.c.l.b16 %v1388
    %v1580 = vunpack.c.h.b16 %v1388
    %v1581 = vunpack.c.l.b16 %v1389
    %v1582 = vunpack.c.h.b16 %v1389
    %v1583 = vunpack.c.l.b16 %v1390
    %v1584 = vunpack.c.h.b16 %v1390
    %v1585 = vunpack.c.l.b16 %v1391
    %v1586 = vunpack.c.h.b16 %v1391
    %v1587 = vunpack.c.l.b16 %v1392
    %v1588 = vunpack.c.h.b16 %v1392
    %v1589 = vunpack.c.l.b16 %v1393
    %v1590 = vunpack.c.h.b16 %v1393
    %v1591 = vunpack.c.l.b16 %v1394
    %v1592 = vunpack.c.h.b16 %v1394
    %v1593 = vunpack.c.l.b16 %v1395
    %v1594 = vunpack.c.h.b16 %v1395
    %v1595 = vunpack.c.l.b16 %v1396
    %v1596 = vunpack.c.h.b16 %v1396
    %v1597 = vunpack.c.l.b16 %v1397
    %v1598 = vunpack.c.h.b16 %v1397
    %v1599 = vunpack.c.l.b16 %v1398
    %v1600 = vunpack.c.h.b16 %v1398
    %v1601 = vunpack.c.l.b16 %v1399
    %v1602 = vunpack.c.h.b16 %v1399
    %v1603 = vunpack.c.l.b16 %v1400
    %v1604 = vunpack.c.h.b16 %v1400
    %v1605 = vunpack.c.l.b16 %v1401
    %v1606 = vunpack.c.h.b16 %v1401
    %v1607 = vunpack.c.l.b16 %v1402
    %v1608 = vunpack.c.h.b16 %v1402
    %v1609 = vunpack.c.l.b16 %v1403
    %v1610 = vunpack.c.h.b16 %v1403
    %v1611 = vunpack.c.l.b16 %v1404
    %v1612 = vunpack.c.h.b16 %v1404
    %v1613 = vunpack.c.l.b16 %v1405
    %v1614 = vunpack.c.h.b16 %v1405
    %v1615 = vunpack.c.l.b16 %v1406
    %v1616 = vunpack.c.h.b16 %v1406
    %v1617 = vunpack.c.l.b16 %v1407
    %v1618 = vunpack.c.h.b16 %v1407
    %v1619 = vunpack.c.l.b16 %v1408
    %v1620 = vunpack.c.h.b16 %v1408
    %v1621 = vunpack.c.l.b16 %v1409
    %v1622 = vunpack.c.h.b16 %v1409
    %v1623 = vunpack.c.l.b16 %v1410
    %v1624 = vunpack.c.h.b16 %v1410
    %v1625 = vunpack.c.l.b16 %v1411
    %v1626 = vunpack.c.h.b16 %v1411
    %v1627 = vunpack.c.l.b16 %v1412
    %v1628 = vunpack.c.h.b16 %v1412
    %v1629 = vunpack.c.l.b16 %v1413
    %v1630 = vunpack.c.h.b16 %v1413
    %v1631 = vunpack.c.l.b16 %v1414
    %v1632 = vunpack.c.h.b16 %v1414
    %v1633 = vunpack.c.l.b16 %v1415
    %v1634 = vunpack.c.h.b16 %v1415
    %v1635 = vunpack.c.l.b16 %v1416
    %v1636 = vunpack.c.h.b16 %v1416
    %v1637 = vunpack.c.l.b16 %v1417
    %v1638 = vunpack.c.h.b16 %v1417
    %v1639 = vunpack.c.l.b16 %v1418
    %v1640 = vunpack.c.h.b16 %v1418
    %v1641 = vunpack.c.l.b16 %v1419
    %v1642 = vunpack.c.h.b16 %v1419
    %v1643 = vunpack.c.l.b16 %v1420
    %v1644 = vunpack.c.h.b16 %v1420
    %v1645 = vunpack.c.l.b16 %v1421
    %v1646 = vunpack.c.h.b16 %v1421
    %v1647 = vunpack.c.l.b16 %v1422
    %v1648 = vunpack.c.h.b16 %v1422
    %v1649 = vunpack.c.l.b16 %v1423
    %v1650 = vunpack.c.h.b16 %v1423
    %v1651 = vunpack.c.l.b16 %v1424
    %v1652 = vunpack.c.h.b16 %v1424
    %v1653 = vunpack.c.l.b16 %v1425
    %v1654 = vunpack.c.h.b16 %v1425
    %v1655 = vunpack.c.l.b16 %v1426
    %v1656 = vunpack.c.h.b16 %v1426
    %v1657 = vunpack.c.l.b16 %v1427
    %v1658 = vunpack.c.h.b16 %v1427
    %v1659 = vunpack.c.l.b16 %v1428
    %v1660 = vunpack.c.h.b16 %v1428
    %v1661 = vunpack.c.l.b16 %v1429
    %v1662 = vunpack.c.h.b16 %v1429
    %v1663 = vunpack.c.l.b16 %v1430
    %v1664 = vunpack.c.h.b16 %v1430
    %v1665 = vunpack.c.l.b16 %v1431
    %v1666 = vunpack.c.h.b16 %v1431
    %v1667 = vunpack.c.l.b16 %v1432
    %v1668 = vunpack.c.h.b16 %v1432
    %v1669 = vunpack.c.l.b16 %v1433
    %v1670 = vunpack.c.h.b16 %v1433
    %v1671 = vunpack.c.l.b16 %v1434
    %v1672 = vunpack.c.h.b16 %v1434
    %v1673 = vunpack.c.l.b16 %v1435
    %v1674 = vunpack.c.h.b16 %v1435
    %v1675 = vunpack.c.l.b16 %v1436
    %v1676 = vunpack.c.h.b16 %v1436
    %v1677 = vunpack.c.l.b16 %v1437
    %v1678 = vunpack.c.h.b16 %v1437
    %v1679 = vunpack.c.l.b16 %v1438
    %v1680 = vunpack.c.h.b16 %v1438
    %v1681 = vunpack.c.l.b16 %v1439
    %v1682 = vunpack.c.h.b16 %v1439
    %v1683 = vunpack.c.l.b16 %v1440
    %v1684 = vunpack.c.h.b16 %v1440
    %v1685 = vunpack.c.l.b16 %v1441
    %v1686 = vunpack.c.h.b16 %v1441
    %v1687 = vunpack.c.l.b16 %v1442
    %v1688 = vunpack.c.h.b16 %v1442
    %v1689 = vunpack.c.l.b16 %v1443
    %v1690 = vunpack.c.h.b16 %v1443
    %v1691 = vunpack.c.l.b16 %v1444
    %v1692 = vunpack.c.h.b16 %v1444
    %v1693 = vunpack.c.l.b16 %v1445
    %v1694 = vunpack.c.h.b16 %v1445
    %v1695 = vunpack.c.l.b16 %v1446
    %v1696 = vunpack.c.h.b16 %v1446
    %v1697 = vunpack.c.l.b16 %v1447
    %v1698 = vunpack.c.h.b16 %v1447
    %v1699 = vunpack.c.l.b16 %v1448
    %v1700 = vunpack.c.h.b16 %v1448
    %v1701 = vunpack.c.l.b16 %v1449
    %v1702 = vunpack.c.h.b16 %v1449
    %v1703 = vunpack.c.l.b16 %v1450
    %v1704 = vunpack.c.h.b16 %v1450
    %v1705 = vunpack.c.l.b16 %v1451
    %v1706 = vunpack.c.h.b16 %v1451
    %v1707 = vunpack.c.l.b16 %v1452
    %v1708 = vunpack.c.h.b16 %v1452
    %v1709 = vunpack.c.l.b16 %v1453
    %v1710 = vunpack.c.h.b16 %v1453
    %v1711 = vunpack.c.l.b16 %v1454
    %v1712 = vunpack.c.h.b16 %v1454
    %v1713 = vunpack.c.l.b16 %v1455
    %v1714 = vunpack.c.h.b16 %v1455
    %v1715 = vunpack.c.l.b16 %v1456
    %v1716 = vunpack.c.h.b16 %v1456
    %v1717 = vunpack.c.l.b16 %v1457
    %v1718 = vunpack.c.h.b16 %v1457
    %v1719 = vunpack.c.l.b16 %v1458
    %v1720 = vunpack.c.h.b16 %v1458
    %v1721 = vunpack.c.l.b16 %v1459
    %v1722 = vunpack.c.h.b16 %v1459
    %v1723 = vunpack.c.l.b16 %v1460
    %v1724 = vunpack.c.h.b16 %v1460
    %v1725 = vpack.c.b16 %v1575, %v1565
    %v1726 = vpack.c.b16 %v1576, %v1566
    %v1727 = vpack.c.b16 %v1577, %v1567
    %v1728 = vpack.c.b16 %v1578, %v1568
    %v1729 = vpack.c.b16 %v1579, %v1569
    %v1730 = vpack.c.b16 %v1580, %v1570
    %v1731 = vpack.c.b16 %v1581, %v1571
    %v1732 = vpack.c.b16 %v1582, %v1572
    %v1733 = vpack.c.b16 %v1583, %v1573
    %v1734 = vpack.c.b16 %v1584, %v1574
    %v1735 = vpack.c.b16 %v1595, %v1585
    %v1736 = vpack.c.b16 %v1596, %v1586
    %v1737 = vpack.c.b16 %v1597, %v1587
    %v1738 = vpack.c.b16 %v1598, %v1588
    %v1739 = vpack.c.b16 %v1599, %v1589
    %v1740 = vpack.c.b16 %v1600, %v1590
    %v1741 = vpack.c.b16 %v1601, %v1591
    %v1742 = vpack.c.b16 %v1602, %v1592
    %v1743 = vpack.c.b16 %v1603, %v1593
    %v1744 = vpack.c.b16 %v1604, %v1594
    %v1745 = vpack.c.b16 %v1615, %v1605
    %v1746 = vpack.c.b16 %v1616, %v1606
    %v1747 = vpack.c.b16 %v1617, %v1607
    %v1748 = vpack.c.b16 %v1618, %v1608
    %v1749 = vpack.c.b16 %v1619, %v1609
    %v1750 = vpack.c.b16 %v1620, %v1610
    %v1751 = vpack.c.b16 %v1621, %v1611
    %v1752 = vpack.c.b16 %v1622, %v1612
    %v1753 = vpack.c.b16 %v1623, %v1613
    %v1754 = vpack.c.b16 %v1624, %v1614
    %v1755 = vpack.c.b16 %v1635, %v1625
    %v1756 = vpack.c.b16 %v1636, %v1626
    %v1757 = vpack.c.b16 %v1637, %v1627
    %v1758 = vpack.c.b16 %v1638, %v1628
    %v1759 = vpack.c.b16 %v1639, %v1629
    %v1760 = vpack.c.b16 %v1640, %v1630
    %v1761 = vpack.c.b16 %v1641, %v1631
    %v1762 = vpack.c.b16 %v1642, %v1632
    %v1763 = vpack.c.b16 %v1643, %v1633
    %v1764 = vpack.c.b16 %v1644, %v1634
    %v1765 = vpack.c.b16 %v1655, %v1645
    %v1766 = vpack.c.b16 %v1656, %v1646
    %v1767 = vpack.c.b16 %v1657, %v1647
    %v1768 = vpack.c.b16 %v1658, %v1648
    %v1769 = vpack.c.b16 %v1659, %v1649
    %v1770 = vpack.c.b16 %v1660, %v1650
    %v1771 = vpack.c.b16 %v1661, %v1651
    %v1772 = vpack.c.b16 %v1662, %v1652
    %v1773 = vpack.c.b16 %v1663, %v1653
    %v1774 = vpack.c.b16 %v1664, %v1654
    %v1775 = vpack.c.b16 %v1675, %v1665
    %v1776 = vpack.c.b16 %v1676, %v1666
    %v1777 = vpack.c.b16 %v1677, %v1667
    %v1778 = vpack.c.b16 %v1678, %v1668
    %v1779 = vpack.c.b16 %v1679, %v1669
    %v1780 = vpack.c.b16 %v1680, %v1670
    %v1781 = vpack.c.b16 %v1681, %v1671
    %v1782 = vpack.c.b16 %v1682, %v1672
    %v1783 = vpack.c.b16 %v1683, %v1673
    %v1784 = vpack.c.b16 %v1684, %v1674
    %v1785 = vpack.c.b16 %v1695, %v1685
    %v1786 = vpack.c.b16 %v1696, %v1686
    %v1787 = vpack.c.b16 %v1697, %v1687
    %v1788 = vpack.c.b16 %v1698, %v1688
    %v1789 = vpack.c.b16 %v1699, %v1689
    %v1790 = vpack.c.b16 %v1700, %v1690
    %v1791 = vpack.c.b16 %v1701, %v1691
    %v1792 = vpack.c.b16 %v1702, %v1692
    %v1793 = vpack.c.b16 %v1703, %v1693
    %v1794 = vpack.c.b16 %v1704, %v1694
    %v1795 = vpack.c.b16 %v1715, %v1705
    %v1796 = vpack.c.b16 %v1716, %v1706
    %v1797 = vpack.c.b16 %v1717, %v1707
    %v1798 = vpack.c.b16 %v1718, %v1708
    %v1799 = vpack.c.b16 %v1719, %v1709
    %v1800 = vpack.c.b16 %v1720, %v1710
    %v1801 = vpack.c.b16 %v1721, %v1711
    %v1802 = vpack.c.b16 %v1722, %v1712
    %v1803 = vpack.c.b16 %v1723, %v1713
    %v1804 = vpack.c.b16 %v1724, %v1714
    %1885 = vmatpush.bf16.msra.mxu0 %v1795
    %1886 = vmatpush.bf16.msra.mxu0 %v1785
    %1887 = vmatpush.bf16.msra.mxu0 %v1775
    %1888 = vmatpush.bf16.msra.mxu0 %v1765
    %1889 = vmatpush.bf16.msra.mxu0 %v1755
    %1890 = vmatpush.bf16.msra.mxu0 %v1745
    %1891 = vmatpush.bf16.msra.mxu0 %v1735
    %1892 = vmatpush.bf16.msra.mxu0 %v1725
    %1893 = vmatmul.bf16.gmra.mxu0 %v1380
    %v1894 = vpop.f32.mrf.mxu0
    %v1895 = vadd.f32 %v1465, %v1894
    %v1896 = vpop.f32.mrf.mxu0
    %v1897 = vadd.f32 %v1465, %v1896
    %1898 = vdwg.mxu0
    %1899 = vmatpush.bf16.msra.mxu0 %v1796
    %1900 = vmatpush.bf16.msra.mxu0 %v1786
    %1901 = vmatpush.bf16.msra.mxu0 %v1776
    %1902 = vmatpush.bf16.msra.mxu0 %v1766
    %1903 = vmatpush.bf16.msra.mxu0 %v1756
    %1904 = vmatpush.bf16.msra.mxu0 %v1746
    %1905 = vmatpush.bf16.msra.mxu0 %v1736
    %1906 = vmatpush.bf16.msra.mxu0 %v1726
    %1907 = vmatmul.bf16.gmra.mxu0 %v1380
    %v1908 = vpop.f32.mrf.mxu0
    %v1909 = vadd.f32 %v1466, %v1908
    %v1910 = vpop.f32.mrf.mxu0
    %v1911 = vadd.f32 %v1466, %v1910
    %1912 = vdwg.mxu0
    %1913 = vmatpush.bf16.msra.mxu0 %v1797
    %1914 = vmatpush.bf16.msra.mxu0 %v1787
    %1915 = vmatpush.bf16.msra.mxu0 %v1777
    %1916 = vmatpush.bf16.msra.mxu0 %v1767
    %1917 = vmatpush.bf16.msra.mxu0 %v1757
    %1918 = vmatpush.bf16.msra.mxu0 %v1747
    %1919 = vmatpush.bf16.msra.mxu0 %v1737
    %1920 = vmatpush.bf16.msra.mxu0 %v1727
    %1921 = vmatmul.bf16.gmra.mxu0 %v1380
    %v1922 = vpop.f32.mrf.mxu0
    %v1923 = vadd.f32 %v1467, %v1922
    %v1924 = vpop.f32.mrf.mxu0
    %v1925 = vadd.f32 %v1467, %v1924
    %1926 = vdwg.mxu0
    %1927 = vmatpush.bf16.msra.mxu0 %v1798
    %1928 = vmatpush.bf16.msra.mxu0 %v1788
    %1929 = vmatpush.bf16.msra.mxu0 %v1778
    %1930 = vmatpush.bf16.msra.mxu0 %v1768
    %1931 = vmatpush.bf16.msra.mxu0 %v1758
    %1932 = vmatpush.bf16.msra.mxu0 %v1748
    %1933 = vmatpush.bf16.msra.mxu0 %v1738
    %1934 = vmatpush.bf16.msra.mxu0 %v1728
    %1935 = vmatmul.bf16.gmra.mxu0 %v1380
    %v1936 = vpop.f32.mrf.mxu0
    %v1937 = vadd.f32 %v1468, %v1936
    %v1938 = vpop.f32.mrf.mxu0
    %v1939 = vadd.f32 %v1468, %v1938
    %1940 = vdwg.mxu0
    %1941 = vmatpush.bf16.msra.mxu0 %v1799
    %1942 = vmatpush.bf16.msra.mxu0 %v1789
    %1943 = vmatpush.bf16.msra.mxu0 %v1779
    %1944 = vmatpush.bf16.msra.mxu0 %v1769
    %1945 = vmatpush.bf16.msra.mxu0 %v1759
    %1946 = vmatpush.bf16.msra.mxu0 %v1749
    %1947 = vmatpush.bf16.msra.mxu0 %v1739
    %1948 = vmatpush.bf16.msra.mxu0 %v1729
    %1949 = vmatmul.bf16.gmra.mxu0 %v1380
    %v1950 = vpop.f32.mrf.mxu0
    %v1951 = vadd.f32 %v1469, %v1950
    %v1952 = vpop.f32.mrf.mxu0
    %v1953 = vadd.f32 %v1469, %v1952
    %1954 = vdwg.mxu0
    %1955 = vmatpush.bf16.msra.mxu0 %v1800
    %1956 = vmatpush.bf16.msra.mxu0 %v1790
    %1957 = vmatpush.bf16.msra.mxu0 %v1780
    %1958 = vmatpush.bf16.msra.mxu0 %v1770
    %1959 = vmatpush.bf16.msra.mxu0 %v1760
    %1960 = vmatpush.bf16.msra.mxu0 %v1750
    %1961 = vmatpush.bf16.msra.mxu0 %v1740
    %1962 = vmatpush.bf16.msra.mxu0 %v1730
    %1963 = vmatmul.bf16.gmra.mxu0 %v1380
    %v1964 = vpop.f32.mrf.mxu0
    %v1965 = vadd.f32 %v1470, %v1964
    %v1966 = vpop.f32.mrf.mxu0
    %v1967 = vadd.f32 %v1470, %v1966
    %1968 = vdwg.mxu0
    %1969 = vmatpush.bf16.msra.mxu0 %v1801
    %1970 = vmatpush.bf16.msra.mxu0 %v1791
    %1971 = vmatpush.bf16.msra.mxu0 %v1781
    %1972 = vmatpush.bf16.msra.mxu0 %v1771
    %1973 = vmatpush.bf16.msra.mxu0 %v1761
    %1974 = vmatpush.bf16.msra.mxu0 %v1751
    %1975 = vmatpush.bf16.msra.mxu0 %v1741
    %1976 = vmatpush.bf16.msra.mxu0 %v1731
    %1977 = vmatmul.bf16.gmra.mxu0 %v1380
    %v1978 = vpop.f32.mrf.mxu0
    %v1979 = vadd.f32 %v1471, %v1978
    %v1980 = vpop.f32.mrf.mxu0
    %v1981 = vadd.f32 %v1471, %v1980
    %1982 = vdwg.mxu0
    %1983 = vmatpush.bf16.msra.mxu0 %v1802
    %1984 = vmatpush.bf16.msra.mxu0 %v1792
    %1985 = vmatpush.bf16.msra.mxu0 %v1782
    %1986 = vmatpush.bf16.msra.mxu0 %v1772
    %1987 = vmatpush.bf16.msra.mxu0 %v1762
    %1988 = vmatpush.bf16.msra.mxu0 %v1752
    %1989 = vmatpush.bf16.msra.mxu0 %v1742
    %1990 = vmatpush.bf16.msra.mxu0 %v1732
    %1991 = vmatmul.bf16.gmra.mxu0 %v1380
    %v1992 = vpop.f32.mrf.mxu0
    %v1993 = vadd.f32 %v1472, %v1992
    %v1994 = vpop.f32.mrf.mxu0
    %v1995 = vadd.f32 %v1472, %v1994
    %1996 = vdwg.mxu0
    %1997 = vmatpush.bf16.msra.mxu0 %v1803
    %1998 = vmatpush.bf16.msra.mxu0 %v1793
    %1999 = vmatpush.bf16.msra.mxu0 %v1783
    %2000 = vmatpush.bf16.msra.mxu0 %v1773
    %2001 = vmatpush.bf16.msra.mxu0 %v1763
    %2002 = vmatpush.bf16.msra.mxu0 %v1753
    %2003 = vmatpush.bf16.msra.mxu0 %v1743
    %2004 = vmatpush.bf16.msra.mxu0 %v1733
    %2005 = vmatmul.bf16.gmra.mxu0 %v1380
    %v2006 = vpop.f32.mrf.mxu0
    %v2007 = vadd.f32 %v1473, %v2006
    %v2008 = vpop.f32.mrf.mxu0
    %v2009 = vadd.f32 %v1473, %v2008
    %2010 = vdwg.mxu0
    %2011 = vmatpush.bf16.msra.mxu0 %v1804
    %2012 = vmatpush.bf16.msra.mxu0 %v1794
    %2013 = vmatpush.bf16.msra.mxu0 %v1784
    %2014 = vmatpush.bf16.msra.mxu0 %v1774
    %2015 = vmatpush.bf16.msra.mxu0 %v1764
    %2016 = vmatpush.bf16.msra.mxu0 %v1754
    %2017 = vmatpush.bf16.msra.mxu0 %v1744
    %2018 = vmatpush.bf16.msra.mxu0 %v1734
    %2019 = vmatmul.bf16.gmra.mxu0 %v1380
    %v2020 = vpop.f32.mrf.mxu0
    %v2021 = vadd.f32 %v1474, %v2020
    %v2022 = vpop.f32.mrf.mxu0
    %v2023 = vadd.f32 %v1474, %v2022
    %2024 = vdwg.mxu0
    %v2025 = vpack.c.bf16 %v1909, %v1895
    %v2026 = vpack.c.bf16 %v1937, %v1923
    %v2027 = vpack.c.bf16 %v1965, %v1951
    %v2028 = vpack.c.bf16 %v1993, %v1979
    %v2029 = vpack.c.bf16 %v2021, %v2007
    %v2030 = vpack.c.bf16 %v1911, %v1897
    %v2031 = vpack.c.bf16 %v1939, %v1925
    %v2032 = vpack.c.bf16 %v1967, %v1953
    %v2033 = vpack.c.bf16 %v1995, %v1981
    %v2034 = vpack.c.bf16 %v2023, %v2009
    %2035 = vst [vmem:[%s11] sm:$0xff] %v2025
    %2036 = vst [vmem:[%s11 + $0x8] sm:$0xff] %v2026
    %2037 = vst [vmem:[%s11 + $0x10] sm:$0xff] %v2027
    %2038 = vst [vmem:[%s11 + $0x18] sm:$0xff] %v2028
    %2039 = vst [vmem:[%s11 + $0x20] sm:$0xff] %v2029
    %2040 = vst [vmem:[%s11 + $0x28] sm:$0xff] %v2030
    %2041 = vst [vmem:[%s11 + $0x30] sm:$0xff] %v2031
    %2042 = vst [vmem:[%s11 + $0x38] sm:$0xff] %v2032
    %2043 = vst [vmem:[%s11 + $0x40] sm:$0xff] %v2033
    %2044 = vst [vmem:[%s11 + $0x48] sm:$0xff] %v2034
    // Predicated region
    $region66: #{simplenet_forward.1} parent=1 // pred_check
      _
    $region67: #{simplenet_forward.1} parent=1 // pred_check_branch
      %2046 = sbr.rel (0) target = $region69
    $region68: #{simplenet_forward.1} parent=1 // pred_region
      _
    $region69: #{simplenet_forward.1} parent=1 // pred_fallthru
      _
    // Predicated region
    $region70: #{simplenet_forward.1} parent=1 // pred_check
      _
    $region71: #{simplenet_forward.1} parent=1 // pred_check_branch
      %2048 = sbr.rel (0) target = $region73
    $region72: #{simplenet_forward.1} parent=1 // pred_region
      _
    $region73: #{simplenet_forward.1} parent=1 // pred_fallthru
      _
    %2049 = vsyncpa [#allocation3], 1
    %2050 = vsyncpa [#allocation5], 1
    %2051 = vsyncpa [#allocation8], 1

</llo_original>
